<compile_context>
chip_gen: v5e
topology: v5e:2x2
jax: 0.10.0
libtpu: 0.0.40
codegen_flags: <defaults>
</compile_context>

<pallas_src>
import functools

import jax
import jax.numpy as jnp
from jax import lax
from jax.experimental import pallas as pl
from jax.experimental.pallas import tpu as pltpu


def _affinity_loss_kernel(x_ref, mask_ref, csq_ref, c_ref, out_ref, feats_ref, *,
                          batch, tb, thw, hw_total, n_hw, lane_partial):
    # Grid positions: read ONLY here (top level).  Using pl.program_id inside a
    # pl.when body puts it inside a lax.cond branch, which the interpret /
    # fallback path cannot substitute (previous compile failure).
    hw_step = pl.program_id(1)
    b0 = pl.program_id(0) * tb

    # --- init the GAP accumulator at the first HW step of each batch tile ----
    @pl.when(hw_step == 0)
    def _():
        feats_ref[...] = jnp.zeros_like(feats_ref)

    # --- GAP partial accumulation --------------------------------------------
    if lane_partial:
        # Pure VALU adds over aligned 128-lane chunks of the x block; the
        # cross-lane (XLU) reduce per row happens once, in the epilogue.
        acc = x_ref[:, :, 0:128].astype(jnp.float32)
        for j in range(1, thw // 128):
            acc = acc + x_ref[:, :, j * 128:(j + 1) * 128].astype(jnp.float32)
        feats_ref[...] += acc                                     # (tb, C, 128)
    else:
        feats_ref[...] += jnp.sum(x_ref[...].astype(jnp.float32), axis=-1)  # (tb, C)

    # --- epilogue: vectorized distmat + loss, once GAP sums are complete -----
    @pl.when(hw_step == n_hw - 1)
    def _():
        if lane_partial:
            feats = jnp.sum(feats_ref[...], axis=-1)              # single XLU reduce
        else:
            feats = feats_ref[...]
        feats = feats * (1.0 / hw_total)                          # (tb, C) pooled

        centers = c_ref[...]                                      # (K, C)
        # Same expansion as the reference: ||f||^2 + ||c||^2 - 2 f.c
        f_sq = jnp.sum(feats * feats, axis=-1, keepdims=True)     # (tb, 1)
        cross = lax.dot_general(                                  # (tb, K) on MXU
            feats, centers, (((1,), (1,)), ((), ())),
            preferred_element_type=jnp.float32,
            precision=lax.Precision.HIGHEST)
        distmat = f_sq + csq_ref[...] - 2.0 * cross               # (tb, K)

        # mask_ref is the one-hot mask pre-scaled by 1 / var(centers).sum();
        # masked-out entries are exactly 0 and clamp up to 1e-12, matching the
        # PyTorch forward (clamp happens AFTER masking).
        dist = jnp.clip(distmat * mask_ref[...], 1e-12, 1e12)
        row_loss = jnp.sum(dist, axis=-1, keepdims=True)          # (tb, 1)

        # Neutralize padded rows of the last batch tile (B % tb != 0).
        row_ids = b0 + lax.broadcasted_iota(jnp.int32, (tb, 1), 0)
        row_loss = jnp.where(row_ids < batch, row_loss, 0.0)

        out_ref[...] = jnp.broadcast_to(jnp.sum(row_loss), out_ref.shape)


def _round_up(x, m):
    return (x + m - 1) // m * m


def _choose_tiles(B, C, HW, *, max_block_bytes=8 * 1024 * 1024):
    """Pick (tb, thw): ~8 MiB x blocks, >=2 batch tiles (v7x), sublane-legal tb."""
    thw = HW
    if HW % 128 == 0:
        while thw % 256 == 0 and C * thw * 4 > max_block_bytes:
            thw //= 2
    tb = max(1, max_block_bytes // max(1, C * thw * 4))
    tb = int(min(tb, B, 256))
    if B > 1:
        tb = min(tb, pl.cdiv(B, 2))          # keep >=2 batch tiles for dual-TC v7x
    # (tb, K) mask block legality: tb must be a multiple of 8 or equal B.
    if tb != B and tb % 8 != 0:
        tb = (tb // 8) * 8 if tb >= 8 else min(8, B)
        while thw % 256 == 0 and tb * C * thw * 4 > 2 * max_block_bytes:
            thw //= 2                        # don't let the sublane bump blow VMEM
    return tb, thw


def affinity_loss(x, centers, labels, *, tb=None, thw=None):
    """x: (B, C, H, W), centers: (K, C), labels: (B,) int -> scalar loss."""
    B, C, H, W = x.shape
    K, Cf = centers.shape
    assert Cf == C, "feat_dim must equal channel count"
    HW = H * W

    tb_d, thw_d = _choose_tiles(B, C, HW)
    tb = tb_d if tb is None else int(tb)
    thw = thw_d if thw is None else int(thw)
    assert HW % thw == 0 and (thw % 128 == 0 or thw == HW), "bad HW tile"
    assert tb == B or tb % 8 == 0, "tb must be a multiple of 8 or equal B"
    n_bt = pl.cdiv(B, tb)
    n_hw = HW // thw

    # Lane-partial accumulation only when the 128x wider scratch is affordable.
    lane_partial = (thw % 128 == 0) and (tb * C * 128 * 4 <= 8 * 1024 * 1024)

    x_flat = x.reshape(B, C, HW)             # contiguous reshape; no transpose / pre-scale
    centers_f32 = centers.astype(jnp.float32)

    # Hoisted tiny XLA prep: one-hot mask scaled by 1/var_sum, center sq-norms.
    # NOTE: num_class == 1 -> torch.var(dim=0) (ddof=1) divides by zero -> NaN,
    # and this reproduces that behaviour.
    var_sum = jnp.sum(jnp.var(centers_f32, axis=0, ddof=1))
    one_hot = (labels.reshape(B, 1).astype(jnp.int32)
               == jnp.arange(K, dtype=jnp.int32)[None, :]).astype(jnp.float32)
    mask_scaled = one_hot / var_sum                                   # (B, K)
    c_sq = jnp.sum(centers_f32 * centers_f32, axis=1)[None, :]        # (1, K)

    kernel = functools.partial(
        _affinity_loss_kernel,
        batch=B, tb=tb, thw=thw, hw_total=HW, n_hw=n_hw, lane_partial=lane_partial,
    )

    # VMEM budget: double-buffered inputs + scratch + output, capped at 48 MiB
    # (headroom under v7x's 64 MiB physical VMEM; explicit limit also covers
    #  v5e's small default scoped limit).
    itemsize = x_flat.dtype.itemsize
    x_block_bytes = tb * C * thw * itemsize
    mask_bytes = _round_up(tb, 8) * _round_up(K, 128) * 4
    csq_bytes = 8 * _round_up(K, 128) * 4
    centers_bytes = _round_up(K, 8) * _round_up(C, 128) * 4
    feats_bytes = (tb * _round_up(C, 8) * 128 * 4) if lane_partial \
        else (_round_up(tb, 8) * _round_up(C, 128) * 4)
    out_bytes = 2 * 8 * 128 * 4
    need = (2 * x_block_bytes + 2 * mask_bytes + 2 * csq_bytes
            + 2 * centers_bytes + feats_bytes + out_bytes)
    vmem_limit = int(min(48 * 1024 * 1024,
                         max(16 * 1024 * 1024, need + 4 * 1024 * 1024)))

    grid_spec = pltpu.PrefetchScalarGridSpec(
        num_scalar_prefetch=0,
        grid=(n_bt, n_hw),                         # reduction (HW) axis last
        in_specs=[
            pl.BlockSpec((tb, C, thw), lambda b, h: (b, 0, h)),
            pl.BlockSpec((tb, K), lambda b, h: (b, 0)),
            pl.BlockSpec((1, K), lambda b, h: (0, 0)),
            pl.BlockSpec((K, C), lambda b, h: (0, 0)),
        ],
        out_specs=pl.BlockSpec((1, 8, 128), lambda b, h: (b, 0, 0)),
        scratch_shapes=[pltpu.VMEM((tb, C, 128) if lane_partial else (tb, C),
                                   jnp.float32)],
    )

    partial_losses = pl.pallas_call(
        kernel,
        out_shape=jax.ShapeDtypeStruct((n_bt, 8, 128), jnp.float32),
        grid_spec=grid_spec,
        compiler_params=pltpu.CompilerParams(
            dimension_semantics=("parallel", "arbitrary"),
            vmem_limit_bytes=vmem_limit,
        ),
    )(x_flat, mask_scaled, c_sq, centers_f32)

    return jnp.sum(partial_losses[:, 0, 0]) / B


def affinity_loss_ref(x, centers, labels):
    """Pure-JAX reference mirroring the PyTorch forward exactly."""
    B = x.shape[0]
    K, C = centers.shape
    feats = jnp.mean(x, axis=(2, 3))                               # gap + view
    distmat = (
        jnp.sum(feats ** 2, axis=1, keepdims=True)
        + jnp.sum(centers ** 2, axis=1)[None, :]
        - 2.0 * jnp.dot(feats, centers.T, precision=jax.lax.Precision.HIGHEST)
    )
    mask = (labels[:, None] == jnp.arange(K)[None, :]).astype(jnp.float32)
    var_sum = jnp.sum(jnp.var(centers, axis=0, ddof=1))
    dist = jnp.clip(distmat * mask / var_sum, 1e-12, 1e12)
    return jnp.sum(dist) / B


if __name__ == "__main__":
    # Small shapes consistent with the module (num_class, feat_dim scaled down).
    B, C, H, W = 16, 64, 16, 16          # HW = 256
    NUM_CLASS = 4

    key = jax.random.PRNGKey(0)
    kx, kc, kl = jax.random.split(key, 3)
    x = jax.random.normal(kx, (B, C, H, W), dtype=jnp.float32)
    centers = jax.random.normal(kc, (NUM_CLASS, C), dtype=jnp.float32)
    labels = jax.random.randint(kl, (B,), 0, NUM_CLASS, dtype=jnp.int32)

    # Explicit small tiles: 2 batch tiles x 2 HW tiles exercises both grid
    # axes, the lane-partial scratch accumulation and the pl.when epilogue.
    loss = affinity_loss(x, centers, labels, tb=8, thw=128)
    jax.block_until_ready(loss)

    loss_ref = affinity_loss_ref(x, centers, labels)
    assert jnp.allclose(loss, loss_ref, rtol=2e-4, atol=1e-5), (loss, loss_ref)

    print("KERNEL_OK")
</pallas_src>

<mosaic_0001>
module attributes {stable_mosaic.version = 11 : i64} {
  func.func @_affinity_loss_kernel(%arg0: i32, %arg1: i32, %arg2: memref<8x64x128xf32, #tpu.memory_space<vmem>>, %arg3: memref<8x4xf32, #tpu.memory_space<vmem>>, %arg4: memref<1x4xf32, #tpu.memory_space<vmem>>, %arg5: memref<4x64xf32, #tpu.memory_space<vmem>>, %arg6: memref<1x8x128xf32, #tpu.memory_space<vmem>>, %arg7: memref<8x64x128xf32, #tpu.memory_space<vmem>>) attributes {dimension_semantics = [#tpu.dimension_semantics<parallel>, #tpu.dimension_semantics<arbitrary>], iteration_bounds = array<i64: 2, 2>, scalar_prefetch = 0 : i64, scratch_operands = 1 : i64, tpu.core_type = #tpu.core_type<tc>, window_params = [{transform_indices = @transform_0, window_bounds = array<i64: 8, 64, 128>}, {transform_indices = @transform_1, window_bounds = array<i64: 8, 4>}, {pipeline_mode = #tpu.pipeline_mode<synchronous>, transform_indices = @transform_2, window_bounds = array<i64: 1, 4>}, {pipeline_mode = #tpu.pipeline_mode<synchronous>, transform_indices = @transform_3, window_bounds = array<i64: 4, 64>}, {transform_indices = @transform_4, window_bounds = array<i64: 1, 8, 128>}]} {
    %c8_i32 = arith.constant 8 : i32
    %0 = arith.muli %arg0, %c8_i32 : i32
    %c0_i32 = arith.constant 0 : i32
    %1 = arith.cmpi eq, %arg1, %c0_i32 : i32
    %2 = arith.extui %1 : i1 to i32
    %c0_i32_0 = arith.constant 0 : i32
    %3 = arith.cmpi ne, %2, %c0_i32_0 : i32
    scf.if %3 {
      %cst = arith.constant 0.000000e+00 : f32
      %11 = vector.broadcast %cst : f32 to vector<8x64x128xf32>
      %c0_10 = arith.constant 0 : index
      %c0_11 = arith.constant 0 : index
      %c0_12 = arith.constant 0 : index
      %12 = vector.load %arg7[%c0_10, %c0_11, %c0_12] : memref<8x64x128xf32, #tpu.memory_space<vmem>>, vector<8x64x128xf32>
      tpu.vector_store %arg7[%c0_10, %c0_11, %c0_12], %11 {strides = array<i32>} : memref<8x64x128xf32, #tpu.memory_space<vmem>>, vector<8x64x128xf32>,
    } else {
    }
    %c0 = arith.constant 0 : index
    %c0_1 = arith.constant 0 : index
    %c0_2 = arith.constant 0 : index
    %4 = vector.load %arg2[%c0, %c0_1, %c0_2] : memref<8x64x128xf32, #tpu.memory_space<vmem>>, vector<8x64x128xf32>
    %c0_3 = arith.constant 0 : index
    %c0_4 = arith.constant 0 : index
    %c0_5 = arith.constant 0 : index
    %5 = vector.load %arg7[%c0_3, %c0_4, %c0_5] : memref<8x64x128xf32, #tpu.memory_space<vmem>>, vector<8x64x128xf32>
    %6 = arith.addf %5, %4 : vector<8x64x128xf32>
    %c0_6 = arith.constant 0 : index
    %c0_7 = arith.constant 0 : index
    %c0_8 = arith.constant 0 : index
    %7 = vector.load %arg7[%c0_6, %c0_7, %c0_8] : memref<8x64x128xf32, #tpu.memory_space<vmem>>, vector<8x64x128xf32>
    tpu.vector_store %arg7[%c0_6, %c0_7, %c0_8], %6 {strides = array<i32>} : memref<8x64x128xf32, #tpu.memory_space<vmem>>, vector<8x64x128xf32>,
    %c1_i32 = arith.constant 1 : i32
    %8 = arith.cmpi eq, %arg1, %c1_i32 : i32
    %9 = arith.extui %8 : i1 to i32
    %c0_i32_9 = arith.constant 0 : i32
    %10 = arith.cmpi ne, %9, %c0_i32_9 : i32
    scf.if %10 {
      %c0_10 = arith.constant 0 : index
      %c0_11 = arith.constant 0 : index
      %c0_12 = arith.constant 0 : index
      %11 = vector.load %arg7[%c0_10, %c0_11, %c0_12] : memref<8x64x128xf32, #tpu.memory_space<vmem>>, vector<8x64x128xf32>
      %cst = arith.constant dense<0.000000e+00> : vector<8x64xf32>
      %12 = vector.multi_reduction <add>, %11, %cst [2] : vector<8x64x128xf32> to vector<8x64xf32>
      %cst_13 = arith.constant 3.906250e-03 : f32
      %13 = vector.broadcast %cst_13 : f32 to vector<8x64xf32>
      %14 = arith.mulf %12, %13 : vector<8x64xf32>
      %c0_14 = arith.constant 0 : index
      %c0_15 = arith.constant 0 : index
      %15 = vector.load %arg5[%c0_14, %c0_15] : memref<4x64xf32, #tpu.memory_space<vmem>>, vector<4x64xf32>
      %16 = arith.mulf %14, %14 : vector<8x64xf32>
      %cst_16 = arith.constant dense<0.000000e+00> : vector<8xf32>
      %17 = vector.multi_reduction <add>, %16, %cst_16 [1] : vector<8x64xf32> to vector<8xf32>
      %18 = vector.shape_cast %17 : vector<8xf32> to vector<8x1xf32>
      %cst_17 = arith.constant dense<0.000000e+00> : vector<8x4xf32>
      %19 = tpu.matmul %14, %15, %cst_17 {dimension_numbers = #tpu.dot_dimension_numbers<[1], [1], [0], [0], [0, 0, 1, 0], [], []>, precision = #tpu.contract_precision<fp32>} : vector<8x64xf32>, vector<4x64xf32>, vector<8x4xf32> -> vector<8x4xf32>
      %c0_18 = arith.constant 0 : index
      %c0_19 = arith.constant 0 : index
      %20 = vector.load %arg4[%c0_18, %c0_19] : memref<1x4xf32, #tpu.memory_space<vmem>>, vector<1x4xf32>
      %21 = vector.broadcast %18 : vector<8x1xf32> to vector<8x4xf32>
      %22 = vector.broadcast %20 : vector<1x4xf32> to vector<8x4xf32>
      %23 = arith.addf %21, %22 : vector<8x4xf32>
      %cst_20 = arith.constant 2.000000e+00 : f32
      %24 = vector.broadcast %cst_20 : f32 to vector<8x4xf32>
      %25 = arith.mulf %24, %19 : vector<8x4xf32>
      %26 = arith.subf %23, %25 : vector<8x4xf32>
      %c0_21 = arith.constant 0 : index
      %c0_22 = arith.constant 0 : index
      %27 = vector.load %arg3[%c0_21, %c0_22] : memref<8x4xf32, #tpu.memory_space<vmem>>, vector<8x4xf32>
      %28 = arith.mulf %26, %27 : vector<8x4xf32>
      %cst_23 = arith.constant 9.99999996E-13 : f32
      %cst_24 = arith.constant 9.99999995E+11 : f32
      %29 = vector.broadcast %cst_23 : f32 to vector<8x4xf32>
      %30 = arith.maximumf %29, %28 : vector<8x4xf32>
      %31 = vector.broadcast %cst_24 : f32 to vector<8x4xf32>
      %32 = arith.minimumf %31, %30 : vector<8x4xf32>
      %cst_25 = arith.constant dense<0.000000e+00> : vector<8xf32>
      %33 = vector.multi_reduction <add>, %32, %cst_25 [1] : vector<8x4xf32> to vector<8xf32>
      %34 = vector.shape_cast %33 : vector<8xf32> to vector<8x1xf32>
      %35 = tpu.iota {dimensions = array<i32: 0>} : vector<8x1xi32>
      %36 = vector.broadcast %0 : i32 to vector<8x1xi32>
      %37 = arith.addi %36, %35 : vector<8x1xi32>
      %c16_i32 = arith.constant 16 : i32
      %38 = vector.broadcast %c16_i32 : i32 to vector<8x1xi32>
      %39 = arith.cmpi slt, %37, %38 : vector<8x1xi32>
      %cst_26 = arith.constant 0.000000e+00 : f32
      %40 = vector.broadcast %cst_26 : f32 to vector<8x1xf32>
      %41 = arith.select %39, %34, %40 : vector<8x1xi1>, vector<8x1xf32>
      %42 = vector.shape_cast %41 : vector<8x1xf32> to vector<1x8x1xf32>
      %cst_27 = arith.constant dense<0.000000e+00> : vector<1xf32>
      %43 = vector.multi_reduction <add>, %42, %cst_27 [1, 2] : vector<1x8x1xf32> to vector<1xf32>
      %44 = vector.shape_cast %43 : vector<1xf32> to vector<1x1x1xf32>
      %45 = vector.extract %44[0, 0, 0] : f32 from vector<1x1x1xf32>
      %46 = vector.broadcast %45 : f32 to vector<1x8x128xf32>
      %c0_28 = arith.constant 0 : index
      %c0_29 = arith.constant 0 : index
      %c0_30 = arith.constant 0 : index
      %47 = vector.load %arg6[%c0_28, %c0_29, %c0_30] : memref<1x8x128xf32, #tpu.memory_space<vmem>>, vector<1x8x128xf32>
      tpu.vector_store %arg6[%c0_28, %c0_29, %c0_30], %46 {strides = array<i32>} : memref<1x8x128xf32, #tpu.memory_space<vmem>>, vector<1x8x128xf32>,
    } else {
    }
    return
  }
  func.func @transform_0(%arg0: i32, %arg1: i32) -> (i32, i32, i32) {
    %c0_i32 = arith.constant 0 : i32
    %c0_i32_0 = arith.constant 0 : i32
    return %arg0, %c0_i32, %arg1 : i32, i32, i32
  }
  func.func @transform_1(%arg0: i32, %arg1: i32) -> (i32, i32) {
    %c0_i32 = arith.constant 0 : i32
    %c0_i32_0 = arith.constant 0 : i32
    return %arg0, %c0_i32 : i32, i32
  }
  func.func @transform_2(%arg0: i32, %arg1: i32) -> (i32, i32) {
    %c0_i32 = arith.constant 0 : i32
    %c0_i32_0 = arith.constant 0 : i32
    %c0_i32_1 = arith.constant 0 : i32
    return %c0_i32, %c0_i32_0 : i32, i32
  }
  func.func @transform_3(%arg0: i32, %arg1: i32) -> (i32, i32) {
    %c0_i32 = arith.constant 0 : i32
    %c0_i32_0 = arith.constant 0 : i32
    %c0_i32_1 = arith.constant 0 : i32
    return %c0_i32, %c0_i32_0 : i32, i32
  }
  func.func @transform_4(%arg0: i32, %arg1: i32) -> (i32, i32, i32) {
    %c0_i32 = arith.constant 0 : i32
    %c0_i32_0 = arith.constant 0 : i32
    %c0_i32_1 = arith.constant 0 : i32
    return %arg0, %c0_i32, %c0_i32_0 : i32, i32, i32
  }
}

</mosaic_0001>

<llo_original>
// kernel: tpu_custom_call.1
$region0: #{tpu_custom_call.1}
  #allocation0 [shape = 'u32[]', space=smem, size = 0x4, offset = 0x4, fixed_abs, tag = 'smem constant byte address 0x4 - core index']
  #allocation1 [shape = 'u32[72,128]{1,0:T(1,128)}', space=vmem, size = 0x9000, scoped, tag = 'internal scratch']
  #allocation2 [shape = 'f32[8,64,128]{2,1,0:T(8,128)}', space=vmem, size = 0x40000, scoped, tag = 'scratch operand']
  %s0 = inlined_call_operand.hbm [shape: f32[16,64,256], index: 0, kind: input, shape index: {}]
  %s1 = inlined_call_operand.vmem [shape: f32[16,4], index: 1, kind: input, shape index: {}]
  %s2 = inlined_call_operand.vmem [shape: f32[1,4], index: 2, kind: input, shape index: {}]
  %s3 = inlined_call_operand.vmem [shape: f32[4,64], index: 3, kind: input, shape index: {}]
  %s4 = inlined_call_operand.hbm [shape: f32[2,8,128], index: 4, kind: output, shape index: {}]
  %s5 = sld [smem:[#allocation0]]
  $region61: #{tpu_custom_call.1} parent=0
    _
  %s7 = ssub.s32 1, %s5
  %s8 = scalar_select 0, %s7, %s5
  $region1: #{tpu_custom_call.1} parent=0
    #allocation3 [shape = 'u8[524288]{0}', space=vmem, size = 0x80000, scoped, tag = 'input window, operand 0']
    #allocation4 [shape = 's32[2]{0}', space=sflag, size = 0x8, scoped, tag = 'scoped memory for tpu_custom_call.1']
    #allocation5 [shape = 's32[2]{0}', space=sflag, size = 0x8, scoped, tag = 'scoped memory for tpu_custom_call.1']
    #allocation6 [shape = 'u8[8192]{0}', space=vmem, size = 0x2000, scoped, tag = 'output window, operand 0']
    %9 = vsyncpa [#allocation4], 0
    %s10 = scalar_lea.sflag [#allocation4], 1
    %11 = vsyncpa %s10, 0
    %12 = vsyncpa [#allocation5], 0
    %s13 = scalar_lea.sflag [#allocation5], 1
    %14 = vsyncpa %s13, 0
    loop: start=0, step=1, limit=6
    $region2: #{tpu_custom_call.1} parent=1 // loop_pre_header
      _
    $region3: #{tpu_custom_call.1} parent=1 // loop_header
      %s16 = sphi 0, %s20
      %p17 = scmp.ge.s32.totalorder %s16, 6
      %s23 = sphi 0, %s35
      %s24 = sphi 0, %s31
      %s25 = sphi 0, %s23
      %s26 = sphi 0, %s24
      %s27 = sphi 0, %s25
      %s28 = sphi 0, %s26
      %s40 = sphi 0, %s42
      %s43 = sphi 0, %s40
      %s44 = sphi 0, %s43
      %s60 = sphi 0, %s44
      %s66 = sphi 0, %s68
      %s69 = sphi 0, %s66
      %s70 = sphi 0, %s69
      %s86 = sphi 0, %s70
      %s90 = sphi 0, %s90
      %s92 = sphi 0, %s90
      %s93 = sphi 0, %s92
      %s107 = sphi 0, %s93
      %s111 = sphi 0, %s111
      %s113 = sphi 0, %s111
      %s114 = sphi 0, %s113
      %s128 = sphi 0, %s114
      %s134 = sphi 0, %s136
      %s137 = sphi 0, %s134
      %s138 = sphi 0, %s137
      %s154 = sphi 0, %s138
    $region4: #{tpu_custom_call.1} parent=1 // loop_header_branch
      %19 = sbr.rel (%p17) target = $region8
    $region5: #{tpu_custom_call.1} parent=1 // loop_body
      %s21 = ssub.s32 %s16, 1
      %s22 = ssub.s32 %s16, 2
      %s29 = sadd.s32 1, %s24
      %p30 = scmp.ge.s32.totalorder %s29, 2
      %s31 = scalar_select %p30, 0, %s29
      %s32 = sadd.s32 1, %s23
      %s33 = scalar_select %p30, %s32, %s23
      %p34 = scmp.ge.s32.totalorder %s33, 2
      %s35 = scalar_select %p34, 0, %s33
      %s36 = ssub.s32 %s23, %s35
      %s37 = ssub.s32 %s24, %s31
      %s38 = sor.u32 %s36, %s37
      %p39 = scmp.eq.s32.totalorder %s38, 0
      %s41 = sadd.s32 %s40, 1
      %s42 = scalar_select %p39, %s40, %s41
      %p45 = pneg %p39
      %p46 = scmp.eq.s32.totalorder %s16, 3
      %p47 = por %p45, %p46
      %p48 = scmp.ne.s32.totalorder %s40, %s43
      %p49 = scmp.eq.s32.totalorder %s16, 0
      %p50 = por %p48, %p49
      %p51 = scmp.ne.s32.totalorder %s40, %s43
      %p52 = scmp.eq.s32.totalorder %s21, 3
      %p53 = por %p51, %p52
      %p54 = scmp.ne.s32.totalorder %s43, %s44
      %p55 = scmp.eq.s32.totalorder %s21, 0
      %p56 = por %p54, %p55
      %p57 = scmp.ne.s32.totalorder %s43, %s44
      %p58 = scmp.eq.s32.totalorder %s22, 3
      %p59 = por %p57, %p58
      %p61 = scmp.ne.s32.totalorder %s44, %s60
      %p62 = scmp.eq.s32.totalorder %s22, 0
      %p63 = por %p61, %p62
      %s64 = ssub.s32 %s23, %s35
      %p65 = scmp.eq.s32.totalorder %s64, 0
      %s67 = sadd.s32 %s66, 1
      %s68 = scalar_select %p65, %s66, %s67
      %p71 = pneg %p65
      %p72 = scmp.eq.s32.totalorder %s16, 3
      %p73 = por %p71, %p72
      %p74 = scmp.ne.s32.totalorder %s66, %s69
      %p75 = scmp.eq.s32.totalorder %s16, 0
      %p76 = por %p74, %p75
      %p77 = scmp.ne.s32.totalorder %s66, %s69
      %p78 = scmp.eq.s32.totalorder %s21, 3
      %p79 = por %p77, %p78
      %p80 = scmp.ne.s32.totalorder %s69, %s70
      %p81 = scmp.eq.s32.totalorder %s21, 0
      %p82 = por %p80, %p81
      %p83 = scmp.ne.s32.totalorder %s69, %s70
      %p84 = scmp.eq.s32.totalorder %s22, 3
      %p85 = por %p83, %p84
      %p87 = scmp.ne.s32.totalorder %s70, %s86
      %p88 = scmp.eq.s32.totalorder %s22, 0
      %p89 = por %p87, %p88
      %s91 = sadd.s32 %s90, 1
      %p94 = scmp.eq.s32.totalorder %s16, 3
      %p95 = scmp.ne.s32.totalorder %s90, %s92
      %p96 = scmp.eq.s32.totalorder %s16, 0
      %p97 = por %p95, %p96
      %p98 = scmp.ne.s32.totalorder %s90, %s92
      %p99 = scmp.eq.s32.totalorder %s21, 3
      %p100 = por %p98, %p99
      %p101 = scmp.ne.s32.totalorder %s92, %s93
      %p102 = scmp.eq.s32.totalorder %s21, 0
      %p103 = por %p101, %p102
      %p104 = scmp.ne.s32.totalorder %s92, %s93
      %p105 = scmp.eq.s32.totalorder %s22, 3
      %p106 = por %p104, %p105
      %p108 = scmp.ne.s32.totalorder %s93, %s107
      %p109 = scmp.eq.s32.totalorder %s22, 0
      %p110 = por %p108, %p109
      %s112 = sadd.s32 %s111, 1
      %p115 = scmp.eq.s32.totalorder %s16, 3
      %p116 = scmp.ne.s32.totalorder %s111, %s113
      %p117 = scmp.eq.s32.totalorder %s16, 0
      %p118 = por %p116, %p117
      %p119 = scmp.ne.s32.totalorder %s111, %s113
      %p120 = scmp.eq.s32.totalorder %s21, 3
      %p121 = por %p119, %p120
      %p122 = scmp.ne.s32.totalorder %s113, %s114
      %p123 = scmp.eq.s32.totalorder %s21, 0
      %p124 = por %p122, %p123
      %p125 = scmp.ne.s32.totalorder %s113, %s114
      %p126 = scmp.eq.s32.totalorder %s22, 3
      %p127 = por %p125, %p126
      %p129 = scmp.ne.s32.totalorder %s114, %s128
      %p130 = scmp.eq.s32.totalorder %s22, 0
      %p131 = por %p129, %p130
      %s132 = ssub.s32 %s23, %s35
      %p133 = scmp.eq.s32.totalorder %s132, 0
      %s135 = sadd.s32 %s134, 1
      %s136 = scalar_select %p133, %s134, %s135
      %p139 = pneg %p133
      %p140 = scmp.eq.s32.totalorder %s16, 3
      %p141 = por %p139, %p140
      %p142 = scmp.ne.s32.totalorder %s134, %s137
      %p143 = scmp.eq.s32.totalorder %s16, 0
      %p144 = por %p142, %p143
      %p145 = scmp.ne.s32.totalorder %s134, %s137
      %p146 = scmp.eq.s32.totalorder %s21, 3
      %p147 = por %p145, %p146
      %p148 = scmp.ne.s32.totalorder %s137, %s138
      %p149 = scmp.eq.s32.totalorder %s21, 0
      %p150 = por %p148, %p149
      %p151 = scmp.ne.s32.totalorder %s137, %s138
      %p152 = scmp.eq.s32.totalorder %s22, 3
      %p153 = por %p151, %p152
      %p155 = scmp.ne.s32.totalorder %s138, %s154
      %p156 = scmp.eq.s32.totalorder %s22, 0
      %p157 = por %p155, %p156
      %p158 = scmp.le.s32.totalorder 1, %s16
      %p159 = scmp.lt.s32.totalorder %s16, 5
      %p160 = pnand %p158, %p159
      %p161 = pneg %p160
      // Predicated region
      $region9: #{tpu_custom_call.1} parent=5 // pred_check
        _
      $region10: #{tpu_custom_call.1} parent=5 // pred_check_branch
        %163 = sbr.rel (%p160) target = $region12
      $region11: #{tpu_custom_call.1} parent=5 // pred_region
        %s164 = ssub.s32 %s16, 1
        // Predicated region
        $region13: #{tpu_custom_call.1} parent=11 // pred_check
          %p165 = pneg %p103
        $region14: #{tpu_custom_call.1} parent=11 // pred_check_branch
          %167 = sbr.rel (%p165) target = $region16
        $region15: #{tpu_custom_call.1} parent=11 // pred_region
          _
        $region16: #{tpu_custom_call.1} parent=11 // pred_fallthru
          _
        // Predicated region
        $region17: #{tpu_custom_call.1} parent=11 // pred_check
          %p168 = pneg %p124
        $region18: #{tpu_custom_call.1} parent=11 // pred_check_branch
          %170 = sbr.rel (%p168) target = $region20
        $region19: #{tpu_custom_call.1} parent=11 // pred_region
          _
        $region20: #{tpu_custom_call.1} parent=11 // pred_fallthru
          _
      $region12: #{tpu_custom_call.1} parent=5 // pred_fallthru
        _
      %p171 = scmp.lt.s32.totalorder %s16, 4
      // Predicated region
      $region21: #{tpu_custom_call.1} parent=5 // pred_check
        %p172 = pneg %p171
      $region22: #{tpu_custom_call.1} parent=5 // pred_check_branch
        %174 = sbr.rel (%p172) target = $region24
      $region23: #{tpu_custom_call.1} parent=5 // pred_region
        // Predicated region
        $region25: #{tpu_custom_call.1} parent=23 // pred_check
          %p175 = pneg %p50
        $region26: #{tpu_custom_call.1} parent=23 // pred_check_branch
          %177 = sbr.rel (%p175) target = $region28
        $region27: #{tpu_custom_call.1} parent=23 // pred_region
          %s178 = sand.u32 %s40, 1
          %s179 = scalar_lea.sflag [#allocation4], %s178
          %s180 = sand.u32 %s40, 1
          %s181 = smul.addr %s180, 512
          %s182 = scalar_lea.vmem [#allocation3], %s181
          %s183 = smul.u32 8, %s23
          %185 = vsyncadd %s179, 0
          %s186 = smul.addr %s183, 16
          %s187 = sadd.s32 %s24, %s186
          %s188 = smul.addr %s187, 8
          %s189 = scalar_lea.hbm %s0, %s188
          %s190 = sshll.u32 %s189, 4
          %s191 = int_to_ptr.hbm [resolvable:$true] %s190
          %s192 = sshll.u32 %s182, 4
          %s193 = int_to_ptr.vmem [resolvable:$true] %s192
          %198 = dma.hbm_to_vmem [thread:$0]  %s191, 8192, %s193, %s179, 256, 128, 8
        $region28: #{tpu_custom_call.1} parent=23 // pred_fallthru
          _
        // Predicated region
        $region29: #{tpu_custom_call.1} parent=23 // pred_check
          %p199 = pneg %p76
        $region30: #{tpu_custom_call.1} parent=23 // pred_check_branch
          %201 = sbr.rel (%p199) target = $region32
        $region31: #{tpu_custom_call.1} parent=23 // pred_region
          %p202 = scmp.lt.s32.totalorder %s23, 1
          %s203 = scalar_select %p202, %s23, 1
          %s204 = smul.addr %s203, 8
          %s205 = scalar_lea.vmem %s1, %s204
        $region32: #{tpu_custom_call.1} parent=23 // pred_fallthru
          _
      $region24: #{tpu_custom_call.1} parent=5 // pred_fallthru
        _
      %p206 = scmp.le.s32.totalorder 1, %s16
      %p207 = scmp.lt.s32.totalorder %s16, 5
      %p208 = pnand %p206, %p207
      %p209 = pneg %p208
      // Predicated region
      $region33: #{tpu_custom_call.1} parent=5 // pred_check
        _
      $region34: #{tpu_custom_call.1} parent=5 // pred_check_branch
        %211 = sbr.rel (%p208) target = $region36
      $region35: #{tpu_custom_call.1} parent=5 // pred_region
        %s212 = ssub.s32 %s16, 1
        %s213 = sand.u32 %s43, 1
        %s214 = scalar_lea.sflag [#allocation4], %s213
        %s215 = sand.u32 %s43, 1
        %s216 = smul.addr %s215, 512
        %s217 = scalar_lea.vmem [#allocation3], %s216
        // Predicated region
        $region37: #{tpu_custom_call.1} parent=35 // pred_check
          %p218 = pneg %p56
        $region38: #{tpu_custom_call.1} parent=35 // pred_check_branch
          %220 = sbr.rel (%p218) target = $region40
        $region39: #{tpu_custom_call.1} parent=35 // pred_region
          %222 = dma.done %s214, 8192
        $region40: #{tpu_custom_call.1} parent=35 // pred_fallthru
          _
        %s223 = sand.u32 %s43, 1
        %s224 = scalar_lea.sflag [#allocation4], %s223
        %s225 = sand.u32 %s43, 1
        %s226 = smul.addr %s225, 512
        %s227 = scalar_lea.vmem [#allocation3], %s226
        %p228 = pneg %p56
        %p229 = pneg %p53
        %p230 = scmp.lt.s32.totalorder %s25, 1
        %s231 = scalar_select %p230, %s25, 1
        %s232 = smul.addr %s231, 8
        %s233 = scalar_lea.vmem %s1, %s232
        %p234 = pneg %p82
        %p235 = pneg %p79
        %p236 = pneg %p103
        %p237 = pneg %p100
        %p238 = pneg %p124
        %p239 = pneg %p121
        %p240 = pneg %p150
        %p241 = pneg %p147
        %s242 = sand.u32 %s137, 1
        %s243 = scalar_lea.sflag [#allocation5], %s242
        %s244 = sand.u32 %s137, 1
        %s245 = smul.addr %s244, 8
        %s246 = scalar_lea.vmem [#allocation6], %s245
        %s247 = smul.u32 8, %s25
        %p248 = scmp.lt.s32.totalorder %s25, 1
        %s249 = scalar_select %p248, %s25, 1
        %s250 = smul.addr %s249, 8
        %s251 = scalar_lea.vmem %s1, %s250
        %s252 = smul.u32 %s25, 8
        %p253 = scmp.eq.s32.totalorder %s26, 0
        // Predicated region
        $region41: #{tpu_custom_call.1} parent=35 // pred_check
          %p254 = pneg %p253
        $region42: #{tpu_custom_call.1} parent=35 // pred_check_branch
          %256 = sbr.rel (%p254) target = $region44
        $region43: #{tpu_custom_call.1} parent=35 // pred_region
          %257 = vst [vmem:[#allocation2] sm:$0xff] 0.0
          %258 = vst [vmem:[#allocation2 + $0x8] sm:$0xff] 0.0
          %259 = vst [vmem:[#allocation2 + $0x10] sm:$0xff] 0.0
          %260 = vst [vmem:[#allocation2 + $0x18] sm:$0xff] 0.0
          %261 = vst [vmem:[#allocation2 + $0x20] sm:$0xff] 0.0
          %262 = vst [vmem:[#allocation2 + $0x28] sm:$0xff] 0.0
          %263 = vst [vmem:[#allocation2 + $0x30] sm:$0xff] 0.0
          %264 = vst [vmem:[#allocation2 + $0x38] sm:$0xff] 0.0
          %265 = vst [vmem:[#allocation2 + $0x40] sm:$0xff] 0.0
          %266 = vst [vmem:[#allocation2 + $0x48] sm:$0xff] 0.0
          %267 = vst [vmem:[#allocation2 + $0x50] sm:$0xff] 0.0
          %268 = vst [vmem:[#allocation2 + $0x58] sm:$0xff] 0.0
          %269 = vst [vmem:[#allocation2 + $0x60] sm:$0xff] 0.0
          %270 = vst [vmem:[#allocation2 + $0x68] sm:$0xff] 0.0
          %271 = vst [vmem:[#allocation2 + $0x70] sm:$0xff] 0.0
          %272 = vst [vmem:[#allocation2 + $0x78] sm:$0xff] 0.0
          %273 = vst [vmem:[#allocation2 + $0x80] sm:$0xff] 0.0
          %274 = vst [vmem:[#allocation2 + $0x88] sm:$0xff] 0.0
          %275 = vst [vmem:[#allocation2 + $0x90] sm:$0xff] 0.0
          %276 = vst [vmem:[#allocation2 + $0x98] sm:$0xff] 0.0
          %277 = vst [vmem:[#allocation2 + $0xa0] sm:$0xff] 0.0
          %278 = vst [vmem:[#allocation2 + $0xa8] sm:$0xff] 0.0
          %279 = vst [vmem:[#allocation2 + $0xb0] sm:$0xff] 0.0
          %280 = vst [vmem:[#allocation2 + $0xb8] sm:$0xff] 0.0
          %281 = vst [vmem:[#allocation2 + $0xc0] sm:$0xff] 0.0
          %282 = vst [vmem:[#allocation2 + $0xc8] sm:$0xff] 0.0
          %283 = vst [vmem:[#allocation2 + $0xd0] sm:$0xff] 0.0
          %284 = vst [vmem:[#allocation2 + $0xd8] sm:$0xff] 0.0
          %285 = vst [vmem:[#allocation2 + $0xe0] sm:$0xff] 0.0
          %286 = vst [vmem:[#allocation2 + $0xe8] sm:$0xff] 0.0
          %287 = vst [vmem:[#allocation2 + $0xf0] sm:$0xff] 0.0
          %288 = vst [vmem:[#allocation2 + $0xf8] sm:$0xff] 0.0
          %289 = vst [vmem:[#allocation2 + $0x100] sm:$0xff] 0.0
          %290 = vst [vmem:[#allocation2 + $0x108] sm:$0xff] 0.0
          %291 = vst [vmem:[#allocation2 + $0x110] sm:$0xff] 0.0
          %292 = vst [vmem:[#allocation2 + $0x118] sm:$0xff] 0.0
          %293 = vst [vmem:[#allocation2 + $0x120] sm:$0xff] 0.0
          %294 = vst [vmem:[#allocation2 + $0x128] sm:$0xff] 0.0
          %295 = vst [vmem:[#allocation2 + $0x130] sm:$0xff] 0.0
          %296 = vst [vmem:[#allocation2 + $0x138] sm:$0xff] 0.0
          %297 = vst [vmem:[#allocation2 + $0x140] sm:$0xff] 0.0
          %298 = vst [vmem:[#allocation2 + $0x148] sm:$0xff] 0.0
          %299 = vst [vmem:[#allocation2 + $0x150] sm:$0xff] 0.0
          %300 = vst [vmem:[#allocation2 + $0x158] sm:$0xff] 0.0
          %301 = vst [vmem:[#allocation2 + $0x160] sm:$0xff] 0.0
          %302 = vst [vmem:[#allocation2 + $0x168] sm:$0xff] 0.0
          %303 = vst [vmem:[#allocation2 + $0x170] sm:$0xff] 0.0
          %304 = vst [vmem:[#allocation2 + $0x178] sm:$0xff] 0.0
          %305 = vst [vmem:[#allocation2 + $0x180] sm:$0xff] 0.0
          %306 = vst [vmem:[#allocation2 + $0x188] sm:$0xff] 0.0
          %307 = vst [vmem:[#allocation2 + $0x190] sm:$0xff] 0.0
          %308 = vst [vmem:[#allocation2 + $0x198] sm:$0xff] 0.0
          %309 = vst [vmem:[#allocation2 + $0x1a0] sm:$0xff] 0.0
          %310 = vst [vmem:[#allocation2 + $0x1a8] sm:$0xff] 0.0
          %311 = vst [vmem:[#allocation2 + $0x1b0] sm:$0xff] 0.0
          %312 = vst [vmem:[#allocation2 + $0x1b8] sm:$0xff] 0.0
          %313 = vst [vmem:[#allocation2 + $0x1c0] sm:$0xff] 0.0
          %314 = vst [vmem:[#allocation2 + $0x1c8] sm:$0xff] 0.0
          %315 = vst [vmem:[#allocation2 + $0x1d0] sm:$0xff] 0.0
          %316 = vst [vmem:[#allocation2 + $0x1d8] sm:$0xff] 0.0
          %317 = vst [vmem:[#allocation2 + $0x1e0] sm:$0xff] 0.0
          %318 = vst [vmem:[#allocation2 + $0x1e8] sm:$0xff] 0.0
          %319 = vst [vmem:[#allocation2 + $0x1f0] sm:$0xff] 0.0
          %320 = vst [vmem:[#allocation2 + $0x1f8] sm:$0xff] 0.0
        $region44: #{tpu_custom_call.1} parent=35 // pred_fallthru
          _
        %v321 = vld [vmem:[%s217] sm:$0xff]
        %v322 = vld [vmem:[%s217 + $0x8] sm:$0xff]
        %v323 = vld [vmem:[%s217 + $0x10] sm:$0xff]
        %v324 = vld [vmem:[%s217 + $0x18] sm:$0xff]
        %v325 = vld [vmem:[%s217 + $0x20] sm:$0xff]
        %v326 = vld [vmem:[%s217 + $0x28] sm:$0xff]
        %v327 = vld [vmem:[%s217 + $0x30] sm:$0xff]
        %v328 = vld [vmem:[%s217 + $0x38] sm:$0xff]
        %v329 = vld [vmem:[%s217 + $0x40] sm:$0xff]
        %v330 = vld [vmem:[%s217 + $0x48] sm:$0xff]
        %v331 = vld [vmem:[%s217 + $0x50] sm:$0xff]
        %v332 = vld [vmem:[%s217 + $0x58] sm:$0xff]
        %v333 = vld [vmem:[%s217 + $0x60] sm:$0xff]
        %v334 = vld [vmem:[%s217 + $0x68] sm:$0xff]
        %v335 = vld [vmem:[%s217 + $0x70] sm:$0xff]
        %v336 = vld [vmem:[%s217 + $0x78] sm:$0xff]
        %v337 = vld [vmem:[%s217 + $0x80] sm:$0xff]
        %v338 = vld [vmem:[%s217 + $0x88] sm:$0xff]
        %v339 = vld [vmem:[%s217 + $0x90] sm:$0xff]
        %v340 = vld [vmem:[%s217 + $0x98] sm:$0xff]
        %v341 = vld [vmem:[%s217 + $0xa0] sm:$0xff]
        %v342 = vld [vmem:[%s217 + $0xa8] sm:$0xff]
        %v343 = vld [vmem:[%s217 + $0xb0] sm:$0xff]
        %v344 = vld [vmem:[%s217 + $0xb8] sm:$0xff]
        %v345 = vld [vmem:[%s217 + $0xc0] sm:$0xff]
        %v346 = vld [vmem:[%s217 + $0xc8] sm:$0xff]
        %v347 = vld [vmem:[%s217 + $0xd0] sm:$0xff]
        %v348 = vld [vmem:[%s217 + $0xd8] sm:$0xff]
        %v349 = vld [vmem:[%s217 + $0xe0] sm:$0xff]
        %v350 = vld [vmem:[%s217 + $0xe8] sm:$0xff]
        %v351 = vld [vmem:[%s217 + $0xf0] sm:$0xff]
        %v352 = vld [vmem:[%s217 + $0xf8] sm:$0xff]
        %v353 = vld [vmem:[%s217 + $0x100] sm:$0xff]
        %v354 = vld [vmem:[%s217 + $0x108] sm:$0xff]
        %v355 = vld [vmem:[%s217 + $0x110] sm:$0xff]
        %v356 = vld [vmem:[%s217 + $0x118] sm:$0xff]
        %v357 = vld [vmem:[%s217 + $0x120] sm:$0xff]
        %v358 = vld [vmem:[%s217 + $0x128] sm:$0xff]
        %v359 = vld [vmem:[%s217 + $0x130] sm:$0xff]
        %v360 = vld [vmem:[%s217 + $0x138] sm:$0xff]
        %v361 = vld [vmem:[%s217 + $0x140] sm:$0xff]
        %v362 = vld [vmem:[%s217 + $0x148] sm:$0xff]
        %v363 = vld [vmem:[%s217 + $0x150] sm:$0xff]
        %v364 = vld [vmem:[%s217 + $0x158] sm:$0xff]
        %v365 = vld [vmem:[%s217 + $0x160] sm:$0xff]
        %v366 = vld [vmem:[%s217 + $0x168] sm:$0xff]
        %v367 = vld [vmem:[%s217 + $0x170] sm:$0xff]
        %v368 = vld [vmem:[%s217 + $0x178] sm:$0xff]
        %v369 = vld [vmem:[%s217 + $0x180] sm:$0xff]
        %v370 = vld [vmem:[%s217 + $0x188] sm:$0xff]
        %v371 = vld [vmem:[%s217 + $0x190] sm:$0xff]
        %v372 = vld [vmem:[%s217 + $0x198] sm:$0xff]
        %v373 = vld [vmem:[%s217 + $0x1a0] sm:$0xff]
        %v374 = vld [vmem:[%s217 + $0x1a8] sm:$0xff]
        %v375 = vld [vmem:[%s217 + $0x1b0] sm:$0xff]
        %v376 = vld [vmem:[%s217 + $0x1b8] sm:$0xff]
        %v377 = vld [vmem:[%s217 + $0x1c0] sm:$0xff]
        %v378 = vld [vmem:[%s217 + $0x1c8] sm:$0xff]
        %v379 = vld [vmem:[%s217 + $0x1d0] sm:$0xff]
        %v380 = vld [vmem:[%s217 + $0x1d8] sm:$0xff]
        %v381 = vld [vmem:[%s217 + $0x1e0] sm:$0xff]
        %v382 = vld [vmem:[%s217 + $0x1e8] sm:$0xff]
        %v383 = vld [vmem:[%s217 + $0x1f0] sm:$0xff]
        %v384 = vld [vmem:[%s217 + $0x1f8] sm:$0xff]
        %v385 = vld [vmem:[#allocation2] sm:$0xff]
        %v386 = vld [vmem:[#allocation2 + $0x8] sm:$0xff]
        %v387 = vld [vmem:[#allocation2 + $0x10] sm:$0xff]
        %v388 = vld [vmem:[#allocation2 + $0x18] sm:$0xff]
        %v389 = vld [vmem:[#allocation2 + $0x20] sm:$0xff]
        %v390 = vld [vmem:[#allocation2 + $0x28] sm:$0xff]
        %v391 = vld [vmem:[#allocation2 + $0x30] sm:$0xff]
        %v392 = vld [vmem:[#allocation2 + $0x38] sm:$0xff]
        %v393 = vld [vmem:[#allocation2 + $0x40] sm:$0xff]
        %v394 = vld [vmem:[#allocation2 + $0x48] sm:$0xff]
        %v395 = vld [vmem:[#allocation2 + $0x50] sm:$0xff]
        %v396 = vld [vmem:[#allocation2 + $0x58] sm:$0xff]
        %v397 = vld [vmem:[#allocation2 + $0x60] sm:$0xff]
        %v398 = vld [vmem:[#allocation2 + $0x68] sm:$0xff]
        %v399 = vld [vmem:[#allocation2 + $0x70] sm:$0xff]
        %v400 = vld [vmem:[#allocation2 + $0x78] sm:$0xff]
        %v401 = vld [vmem:[#allocation2 + $0x80] sm:$0xff]
        %v402 = vld [vmem:[#allocation2 + $0x88] sm:$0xff]
        %v403 = vld [vmem:[#allocation2 + $0x90] sm:$0xff]
        %v404 = vld [vmem:[#allocation2 + $0x98] sm:$0xff]
        %v405 = vld [vmem:[#allocation2 + $0xa0] sm:$0xff]
        %v406 = vld [vmem:[#allocation2 + $0xa8] sm:$0xff]
        %v407 = vld [vmem:[#allocation2 + $0xb0] sm:$0xff]
        %v408 = vld [vmem:[#allocation2 + $0xb8] sm:$0xff]
        %v409 = vld [vmem:[#allocation2 + $0xc0] sm:$0xff]
        %v410 = vld [vmem:[#allocation2 + $0xc8] sm:$0xff]
        %v411 = vld [vmem:[#allocation2 + $0xd0] sm:$0xff]
        %v412 = vld [vmem:[#allocation2 + $0xd8] sm:$0xff]
        %v413 = vld [vmem:[#allocation2 + $0xe0] sm:$0xff]
        %v414 = vld [vmem:[#allocation2 + $0xe8] sm:$0xff]
        %v415 = vld [vmem:[#allocation2 + $0xf0] sm:$0xff]
        %v416 = vld [vmem:[#allocation2 + $0xf8] sm:$0xff]
        %v417 = vld [vmem:[#allocation2 + $0x100] sm:$0xff]
        %v418 = vld [vmem:[#allocation2 + $0x108] sm:$0xff]
        %v419 = vld [vmem:[#allocation2 + $0x110] sm:$0xff]
        %v420 = vld [vmem:[#allocation2 + $0x118] sm:$0xff]
        %v421 = vld [vmem:[#allocation2 + $0x120] sm:$0xff]
        %v422 = vld [vmem:[#allocation2 + $0x128] sm:$0xff]
        %v423 = vld [vmem:[#allocation2 + $0x130] sm:$0xff]
        %v424 = vld [vmem:[#allocation2 + $0x138] sm:$0xff]
        %v425 = vld [vmem:[#allocation2 + $0x140] sm:$0xff]
        %v426 = vld [vmem:[#allocation2 + $0x148] sm:$0xff]
        %v427 = vld [vmem:[#allocation2 + $0x150] sm:$0xff]
        %v428 = vld [vmem:[#allocation2 + $0x158] sm:$0xff]
        %v429 = vld [vmem:[#allocation2 + $0x160] sm:$0xff]
        %v430 = vld [vmem:[#allocation2 + $0x168] sm:$0xff]
        %v431 = vld [vmem:[#allocation2 + $0x170] sm:$0xff]
        %v432 = vld [vmem:[#allocation2 + $0x178] sm:$0xff]
        %v433 = vld [vmem:[#allocation2 + $0x180] sm:$0xff]
        %v434 = vld [vmem:[#allocation2 + $0x188] sm:$0xff]
        %v435 = vld [vmem:[#allocation2 + $0x190] sm:$0xff]
        %v436 = vld [vmem:[#allocation2 + $0x198] sm:$0xff]
        %v437 = vld [vmem:[#allocation2 + $0x1a0] sm:$0xff]
        %v438 = vld [vmem:[#allocation2 + $0x1a8] sm:$0xff]
        %v439 = vld [vmem:[#allocation2 + $0x1b0] sm:$0xff]
        %v440 = vld [vmem:[#allocation2 + $0x1b8] sm:$0xff]
        %v441 = vld [vmem:[#allocation2 + $0x1c0] sm:$0xff]
        %v442 = vld [vmem:[#allocation2 + $0x1c8] sm:$0xff]
        %v443 = vld [vmem:[#allocation2 + $0x1d0] sm:$0xff]
        %v444 = vld [vmem:[#allocation2 + $0x1d8] sm:$0xff]
        %v445 = vld [vmem:[#allocation2 + $0x1e0] sm:$0xff]
        %v446 = vld [vmem:[#allocation2 + $0x1e8] sm:$0xff]
        %v447 = vld [vmem:[#allocation2 + $0x1f0] sm:$0xff]
        %v448 = vld [vmem:[#allocation2 + $0x1f8] sm:$0xff]
        %v449 = vadd.f32 %v385, %v321
        %v450 = vadd.f32 %v386, %v322
        %v451 = vadd.f32 %v387, %v323
        %v452 = vadd.f32 %v388, %v324
        %v453 = vadd.f32 %v389, %v325
        %v454 = vadd.f32 %v390, %v326
        %v455 = vadd.f32 %v391, %v327
        %v456 = vadd.f32 %v392, %v328
        %v457 = vadd.f32 %v393, %v329
        %v458 = vadd.f32 %v394, %v330
        %v459 = vadd.f32 %v395, %v331
        %v460 = vadd.f32 %v396, %v332
        %v461 = vadd.f32 %v397, %v333
        %v462 = vadd.f32 %v398, %v334
        %v463 = vadd.f32 %v399, %v335
        %v464 = vadd.f32 %v400, %v336
        %v465 = vadd.f32 %v401, %v337
        %v466 = vadd.f32 %v402, %v338
        %v467 = vadd.f32 %v403, %v339
        %v468 = vadd.f32 %v404, %v340
        %v469 = vadd.f32 %v405, %v341
        %v470 = vadd.f32 %v406, %v342
        %v471 = vadd.f32 %v407, %v343
        %v472 = vadd.f32 %v408, %v344
        %v473 = vadd.f32 %v409, %v345
        %v474 = vadd.f32 %v410, %v346
        %v475 = vadd.f32 %v411, %v347
        %v476 = vadd.f32 %v412, %v348
        %v477 = vadd.f32 %v413, %v349
        %v478 = vadd.f32 %v414, %v350
        %v479 = vadd.f32 %v415, %v351
        %v480 = vadd.f32 %v416, %v352
        %v481 = vadd.f32 %v417, %v353
        %v482 = vadd.f32 %v418, %v354
        %v483 = vadd.f32 %v419, %v355
        %v484 = vadd.f32 %v420, %v356
        %v485 = vadd.f32 %v421, %v357
        %v486 = vadd.f32 %v422, %v358
        %v487 = vadd.f32 %v423, %v359
        %v488 = vadd.f32 %v424, %v360
        %v489 = vadd.f32 %v425, %v361
        %v490 = vadd.f32 %v426, %v362
        %v491 = vadd.f32 %v427, %v363
        %v492 = vadd.f32 %v428, %v364
        %v493 = vadd.f32 %v429, %v365
        %v494 = vadd.f32 %v430, %v366
        %v495 = vadd.f32 %v431, %v367
        %v496 = vadd.f32 %v432, %v368
        %v497 = vadd.f32 %v433, %v369
        %v498 = vadd.f32 %v434, %v370
        %v499 = vadd.f32 %v435, %v371
        %v500 = vadd.f32 %v436, %v372
        %v501 = vadd.f32 %v437, %v373
        %v502 = vadd.f32 %v438, %v374
        %v503 = vadd.f32 %v439, %v375
        %v504 = vadd.f32 %v440, %v376
        %v505 = vadd.f32 %v441, %v377
        %v506 = vadd.f32 %v442, %v378
        %v507 = vadd.f32 %v443, %v379
        %v508 = vadd.f32 %v444, %v380
        %v509 = vadd.f32 %v445, %v381
        %v510 = vadd.f32 %v446, %v382
        %v511 = vadd.f32 %v447, %v383
        %v512 = vadd.f32 %v448, %v384
        %513 = vst [vmem:[#allocation2] sm:$0xff] %v449
        %514 = vst [vmem:[#allocation2 + $0x8] sm:$0xff] %v450
        %515 = vst [vmem:[#allocation2 + $0x10] sm:$0xff] %v451
        %516 = vst [vmem:[#allocation2 + $0x18] sm:$0xff] %v452
        %517 = vst [vmem:[#allocation2 + $0x20] sm:$0xff] %v453
        %518 = vst [vmem:[#allocation2 + $0x28] sm:$0xff] %v454
        %519 = vst [vmem:[#allocation2 + $0x30] sm:$0xff] %v455
        %520 = vst [vmem:[#allocation2 + $0x38] sm:$0xff] %v456
        %521 = vst [vmem:[#allocation2 + $0x40] sm:$0xff] %v457
        %522 = vst [vmem:[#allocation2 + $0x48] sm:$0xff] %v458
        %523 = vst [vmem:[#allocation2 + $0x50] sm:$0xff] %v459
        %524 = vst [vmem:[#allocation2 + $0x58] sm:$0xff] %v460
        %525 = vst [vmem:[#allocation2 + $0x60] sm:$0xff] %v461
        %526 = vst [vmem:[#allocation2 + $0x68] sm:$0xff] %v462
        %527 = vst [vmem:[#allocation2 + $0x70] sm:$0xff] %v463
        %528 = vst [vmem:[#allocation2 + $0x78] sm:$0xff] %v464
        %529 = vst [vmem:[#allocation2 + $0x80] sm:$0xff] %v465
        %530 = vst [vmem:[#allocation2 + $0x88] sm:$0xff] %v466
        %531 = vst [vmem:[#allocation2 + $0x90] sm:$0xff] %v467
        %532 = vst [vmem:[#allocation2 + $0x98] sm:$0xff] %v468
        %533 = vst [vmem:[#allocation2 + $0xa0] sm:$0xff] %v469
        %534 = vst [vmem:[#allocation2 + $0xa8] sm:$0xff] %v470
        %535 = vst [vmem:[#allocation2 + $0xb0] sm:$0xff] %v471
        %536 = vst [vmem:[#allocation2 + $0xb8] sm:$0xff] %v472
        %537 = vst [vmem:[#allocation2 + $0xc0] sm:$0xff] %v473
        %538 = vst [vmem:[#allocation2 + $0xc8] sm:$0xff] %v474
        %539 = vst [vmem:[#allocation2 + $0xd0] sm:$0xff] %v475
        %540 = vst [vmem:[#allocation2 + $0xd8] sm:$0xff] %v476
        %541 = vst [vmem:[#allocation2 + $0xe0] sm:$0xff] %v477
        %542 = vst [vmem:[#allocation2 + $0xe8] sm:$0xff] %v478
        %543 = vst [vmem:[#allocation2 + $0xf0] sm:$0xff] %v479
        %544 = vst [vmem:[#allocation2 + $0xf8] sm:$0xff] %v480
        %545 = vst [vmem:[#allocation2 + $0x100] sm:$0xff] %v481
        %546 = vst [vmem:[#allocation2 + $0x108] sm:$0xff] %v482
        %547 = vst [vmem:[#allocation2 + $0x110] sm:$0xff] %v483
        %548 = vst [vmem:[#allocation2 + $0x118] sm:$0xff] %v484
        %549 = vst [vmem:[#allocation2 + $0x120] sm:$0xff] %v485
        %550 = vst [vmem:[#allocation2 + $0x128] sm:$0xff] %v486
        %551 = vst [vmem:[#allocation2 + $0x130] sm:$0xff] %v487
        %552 = vst [vmem:[#allocation2 + $0x138] sm:$0xff] %v488
        %553 = vst [vmem:[#allocation2 + $0x140] sm:$0xff] %v489
        %554 = vst [vmem:[#allocation2 + $0x148] sm:$0xff] %v490
        %555 = vst [vmem:[#allocation2 + $0x150] sm:$0xff] %v491
        %556 = vst [vmem:[#allocation2 + $0x158] sm:$0xff] %v492
        %557 = vst [vmem:[#allocation2 + $0x160] sm:$0xff] %v493
        %558 = vst [vmem:[#allocation2 + $0x168] sm:$0xff] %v494
        %559 = vst [vmem:[#allocation2 + $0x170] sm:$0xff] %v495
        %560 = vst [vmem:[#allocation2 + $0x178] sm:$0xff] %v496
        %561 = vst [vmem:[#allocation2 + $0x180] sm:$0xff] %v497
        %562 = vst [vmem:[#allocation2 + $0x188] sm:$0xff] %v498
        %563 = vst [vmem:[#allocation2 + $0x190] sm:$0xff] %v499
        %564 = vst [vmem:[#allocation2 + $0x198] sm:$0xff] %v500
        %565 = vst [vmem:[#allocation2 + $0x1a0] sm:$0xff] %v501
        %566 = vst [vmem:[#allocation2 + $0x1a8] sm:$0xff] %v502
        %567 = vst [vmem:[#allocation2 + $0x1b0] sm:$0xff] %v503
        %568 = vst [vmem:[#allocation2 + $0x1b8] sm:$0xff] %v504
        %569 = vst [vmem:[#allocation2 + $0x1c0] sm:$0xff] %v505
        %570 = vst [vmem:[#allocation2 + $0x1c8] sm:$0xff] %v506
        %571 = vst [vmem:[#allocation2 + $0x1d0] sm:$0xff] %v507
        %572 = vst [vmem:[#allocation2 + $0x1d8] sm:$0xff] %v508
        %573 = vst [vmem:[#allocation2 + $0x1e0] sm:$0xff] %v509
        %574 = vst [vmem:[#allocation2 + $0x1e8] sm:$0xff] %v510
        %575 = vst [vmem:[#allocation2 + $0x1f0] sm:$0xff] %v511
        %576 = vst [vmem:[#allocation2 + $0x1f8] sm:$0xff] %v512
        %p577 = scmp.eq.s32.totalorder %s26, 1
        // Predicated region
        $region45: #{tpu_custom_call.1} parent=35 // pred_check
          %p578 = pneg %p577
        $region46: #{tpu_custom_call.1} parent=35 // pred_check_branch
          %580 = sbr.rel (%p578) target = $region48
        $region47: #{tpu_custom_call.1} parent=35 // pred_region
          %v581 = vld [vmem:[#allocation2] sm:$0xff]
          %v582 = vld [vmem:[#allocation2 + $0x8] sm:$0xff]
          %v583 = vld [vmem:[#allocation2 + $0x10] sm:$0xff]
          %v584 = vld [vmem:[#allocation2 + $0x18] sm:$0xff]
          %v585 = vld [vmem:[#allocation2 + $0x20] sm:$0xff]
          %v586 = vld [vmem:[#allocation2 + $0x28] sm:$0xff]
          %v587 = vld [vmem:[#allocation2 + $0x30] sm:$0xff]
          %v588 = vld [vmem:[#allocation2 + $0x38] sm:$0xff]
          %v589 = vld [vmem:[#allocation2 + $0x40] sm:$0xff]
          %v590 = vld [vmem:[#allocation2 + $0x48] sm:$0xff]
          %v591 = vld [vmem:[#allocation2 + $0x50] sm:$0xff]
          %v592 = vld [vmem:[#allocation2 + $0x58] sm:$0xff]
          %v593 = vld [vmem:[#allocation2 + $0x60] sm:$0xff]
          %v594 = vld [vmem:[#allocation2 + $0x68] sm:$0xff]
          %v595 = vld [vmem:[#allocation2 + $0x70] sm:$0xff]
          %v596 = vld [vmem:[#allocation2 + $0x78] sm:$0xff]
          %v597 = vld [vmem:[#allocation2 + $0x80] sm:$0xff]
          %v598 = vld [vmem:[#allocation2 + $0x88] sm:$0xff]
          %v599 = vld [vmem:[#allocation2 + $0x90] sm:$0xff]
          %v600 = vld [vmem:[#allocation2 + $0x98] sm:$0xff]
          %v601 = vld [vmem:[#allocation2 + $0xa0] sm:$0xff]
          %v602 = vld [vmem:[#allocation2 + $0xa8] sm:$0xff]
          %v603 = vld [vmem:[#allocation2 + $0xb0] sm:$0xff]
          %v604 = vld [vmem:[#allocation2 + $0xb8] sm:$0xff]
          %v605 = vld [vmem:[#allocation2 + $0xc0] sm:$0xff]
          %v606 = vld [vmem:[#allocation2 + $0xc8] sm:$0xff]
          %v607 = vld [vmem:[#allocation2 + $0xd0] sm:$0xff]
          %v608 = vld [vmem:[#allocation2 + $0xd8] sm:$0xff]
          %v609 = vld [vmem:[#allocation2 + $0xe0] sm:$0xff]
          %v610 = vld [vmem:[#allocation2 + $0xe8] sm:$0xff]
          %v611 = vld [vmem:[#allocation2 + $0xf0] sm:$0xff]
          %v612 = vld [vmem:[#allocation2 + $0xf8] sm:$0xff]
          %v613 = vld [vmem:[#allocation2 + $0x100] sm:$0xff]
          %v614 = vld [vmem:[#allocation2 + $0x108] sm:$0xff]
          %v615 = vld [vmem:[#allocation2 + $0x110] sm:$0xff]
          %v616 = vld [vmem:[#allocation2 + $0x118] sm:$0xff]
          %v617 = vld [vmem:[#allocation2 + $0x120] sm:$0xff]
          %v618 = vld [vmem:[#allocation2 + $0x128] sm:$0xff]
          %v619 = vld [vmem:[#allocation2 + $0x130] sm:$0xff]
          %v620 = vld [vmem:[#allocation2 + $0x138] sm:$0xff]
          %v621 = vld [vmem:[#allocation2 + $0x140] sm:$0xff]
          %v622 = vld [vmem:[#allocation2 + $0x148] sm:$0xff]
          %v623 = vld [vmem:[#allocation2 + $0x150] sm:$0xff]
          %v624 = vld [vmem:[#allocation2 + $0x158] sm:$0xff]
          %v625 = vld [vmem:[#allocation2 + $0x160] sm:$0xff]
          %v626 = vld [vmem:[#allocation2 + $0x168] sm:$0xff]
          %v627 = vld [vmem:[#allocation2 + $0x170] sm:$0xff]
          %v628 = vld [vmem:[#allocation2 + $0x178] sm:$0xff]
          %v629 = vld [vmem:[#allocation2 + $0x180] sm:$0xff]
          %v630 = vld [vmem:[#allocation2 + $0x188] sm:$0xff]
          %v631 = vld [vmem:[#allocation2 + $0x190] sm:$0xff]
          %v632 = vld [vmem:[#allocation2 + $0x198] sm:$0xff]
          %v633 = vld [vmem:[#allocation2 + $0x1a0] sm:$0xff]
          %v634 = vld [vmem:[#allocation2 + $0x1a8] sm:$0xff]
          %v635 = vld [vmem:[#allocation2 + $0x1b0] sm:$0xff]
          %v636 = vld [vmem:[#allocation2 + $0x1b8] sm:$0xff]
          %v637 = vld [vmem:[#allocation2 + $0x1c0] sm:$0xff]
          %v638 = vld [vmem:[#allocation2 + $0x1c8] sm:$0xff]
          %v639 = vld [vmem:[#allocation2 + $0x1d0] sm:$0xff]
          %v640 = vld [vmem:[#allocation2 + $0x1d8] sm:$0xff]
          %v641 = vld [vmem:[#allocation2 + $0x1e0] sm:$0xff]
          %v642 = vld [vmem:[#allocation2 + $0x1e8] sm:$0xff]
          %v643 = vld [vmem:[#allocation2 + $0x1f0] sm:$0xff]
          %v644 = vld [vmem:[#allocation2 + $0x1f8] sm:$0xff]
          %645 = vadd.xlane.f32.xlu0 %v581
          %v646 = vpop.xlane.xlu0 %645
          %647 = vadd.xlane.f32.xlu0 %v582
          %v648 = vpop.xlane.xlu0 %647
          %649 = vadd.xlane.f32.xlu0 %v583
          %v650 = vpop.xlane.xlu0 %649
          %651 = vadd.xlane.f32.xlu0 %v584
          %v652 = vpop.xlane.xlu0 %651
          %653 = vadd.xlane.f32.xlu0 %v585
          %v654 = vpop.xlane.xlu0 %653
          %655 = vadd.xlane.f32.xlu0 %v586
          %v656 = vpop.xlane.xlu0 %655
          %657 = vadd.xlane.f32.xlu0 %v587
          %v658 = vpop.xlane.xlu0 %657
          %659 = vadd.xlane.f32.xlu0 %v588
          %v660 = vpop.xlane.xlu0 %659
          %661 = vadd.xlane.f32.xlu0 %v589
          %v662 = vpop.xlane.xlu0 %661
          %663 = vadd.xlane.f32.xlu0 %v590
          %v664 = vpop.xlane.xlu0 %663
          %665 = vadd.xlane.f32.xlu0 %v591
          %v666 = vpop.xlane.xlu0 %665
          %667 = vadd.xlane.f32.xlu0 %v592
          %v668 = vpop.xlane.xlu0 %667
          %669 = vadd.xlane.f32.xlu0 %v593
          %v670 = vpop.xlane.xlu0 %669
          %671 = vadd.xlane.f32.xlu0 %v594
          %v672 = vpop.xlane.xlu0 %671
          %673 = vadd.xlane.f32.xlu0 %v595
          %v674 = vpop.xlane.xlu0 %673
          %675 = vadd.xlane.f32.xlu0 %v596
          %v676 = vpop.xlane.xlu0 %675
          %677 = vadd.xlane.f32.xlu0 %v597
          %v678 = vpop.xlane.xlu0 %677
          %679 = vadd.xlane.f32.xlu0 %v598
          %v680 = vpop.xlane.xlu0 %679
          %681 = vadd.xlane.f32.xlu0 %v599
          %v682 = vpop.xlane.xlu0 %681
          %683 = vadd.xlane.f32.xlu0 %v600
          %v684 = vpop.xlane.xlu0 %683
          %685 = vadd.xlane.f32.xlu0 %v601
          %v686 = vpop.xlane.xlu0 %685
          %687 = vadd.xlane.f32.xlu0 %v602
          %v688 = vpop.xlane.xlu0 %687
          %689 = vadd.xlane.f32.xlu0 %v603
          %v690 = vpop.xlane.xlu0 %689
          %691 = vadd.xlane.f32.xlu0 %v604
          %v692 = vpop.xlane.xlu0 %691
          %693 = vadd.xlane.f32.xlu0 %v605
          %v694 = vpop.xlane.xlu0 %693
          %695 = vadd.xlane.f32.xlu0 %v606
          %v696 = vpop.xlane.xlu0 %695
          %697 = vadd.xlane.f32.xlu0 %v607
          %v698 = vpop.xlane.xlu0 %697
          %699 = vadd.xlane.f32.xlu0 %v608
          %v700 = vpop.xlane.xlu0 %699
          %701 = vadd.xlane.f32.xlu0 %v609
          %v702 = vpop.xlane.xlu0 %701
          %703 = vadd.xlane.f32.xlu0 %v610
          %v704 = vpop.xlane.xlu0 %703
          %705 = vadd.xlane.f32.xlu0 %v611
          %v706 = vpop.xlane.xlu0 %705
          %707 = vadd.xlane.f32.xlu0 %v612
          %v708 = vpop.xlane.xlu0 %707
          %709 = vadd.xlane.f32.xlu0 %v613
          %v710 = vpop.xlane.xlu0 %709
          %711 = vadd.xlane.f32.xlu0 %v614
          %v712 = vpop.xlane.xlu0 %711
          %713 = vadd.xlane.f32.xlu0 %v615
          %v714 = vpop.xlane.xlu0 %713
          %715 = vadd.xlane.f32.xlu0 %v616
          %v716 = vpop.xlane.xlu0 %715
          %717 = vadd.xlane.f32.xlu0 %v617
          %v718 = vpop.xlane.xlu0 %717
          %719 = vadd.xlane.f32.xlu0 %v618
          %v720 = vpop.xlane.xlu0 %719
          %721 = vadd.xlane.f32.xlu0 %v619
          %v722 = vpop.xlane.xlu0 %721
          %723 = vadd.xlane.f32.xlu0 %v620
          %v724 = vpop.xlane.xlu0 %723
          %725 = vadd.xlane.f32.xlu0 %v621
          %v726 = vpop.xlane.xlu0 %725
          %727 = vadd.xlane.f32.xlu0 %v622
          %v728 = vpop.xlane.xlu0 %727
          %729 = vadd.xlane.f32.xlu0 %v623
          %v730 = vpop.xlane.xlu0 %729
          %731 = vadd.xlane.f32.xlu0 %v624
          %v732 = vpop.xlane.xlu0 %731
          %733 = vadd.xlane.f32.xlu0 %v625
          %v734 = vpop.xlane.xlu0 %733
          %735 = vadd.xlane.f32.xlu0 %v626
          %v736 = vpop.xlane.xlu0 %735
          %737 = vadd.xlane.f32.xlu0 %v627
          %v738 = vpop.xlane.xlu0 %737
          %739 = vadd.xlane.f32.xlu0 %v628
          %v740 = vpop.xlane.xlu0 %739
          %741 = vadd.xlane.f32.xlu0 %v629
          %v742 = vpop.xlane.xlu0 %741
          %743 = vadd.xlane.f32.xlu0 %v630
          %v744 = vpop.xlane.xlu0 %743
          %745 = vadd.xlane.f32.xlu0 %v631
          %v746 = vpop.xlane.xlu0 %745
          %747 = vadd.xlane.f32.xlu0 %v632
          %v748 = vpop.xlane.xlu0 %747
          %749 = vadd.xlane.f32.xlu0 %v633
          %v750 = vpop.xlane.xlu0 %749
          %751 = vadd.xlane.f32.xlu0 %v634
          %v752 = vpop.xlane.xlu0 %751
          %753 = vadd.xlane.f32.xlu0 %v635
          %v754 = vpop.xlane.xlu0 %753
          %755 = vadd.xlane.f32.xlu0 %v636
          %v756 = vpop.xlane.xlu0 %755
          %757 = vadd.xlane.f32.xlu0 %v637
          %v758 = vpop.xlane.xlu0 %757
          %759 = vadd.xlane.f32.xlu0 %v638
          %v760 = vpop.xlane.xlu0 %759
          %761 = vadd.xlane.f32.xlu0 %v639
          %v762 = vpop.xlane.xlu0 %761
          %763 = vadd.xlane.f32.xlu0 %v640
          %v764 = vpop.xlane.xlu0 %763
          %765 = vadd.xlane.f32.xlu0 %v641
          %v766 = vpop.xlane.xlu0 %765
          %767 = vadd.xlane.f32.xlu0 %v642
          %v768 = vpop.xlane.xlu0 %767
          %769 = vadd.xlane.f32.xlu0 %v643
          %v770 = vpop.xlane.xlu0 %769
          %771 = vadd.xlane.f32.xlu0 %v644
          %v772 = vpop.xlane.xlu0 %771
          %v773 = vmul.f32 %v646, 0.00390625
          %v774 = vmul.f32 %v648, 0.00390625
          %v775 = vmul.f32 %v650, 0.00390625
          %v776 = vmul.f32 %v652, 0.00390625
          %v777 = vmul.f32 %v654, 0.00390625
          %v778 = vmul.f32 %v656, 0.00390625
          %v779 = vmul.f32 %v658, 0.00390625
          %v780 = vmul.f32 %v660, 0.00390625
          %v781 = vmul.f32 %v662, 0.00390625
          %v782 = vmul.f32 %v664, 0.00390625
          %v783 = vmul.f32 %v666, 0.00390625
          %v784 = vmul.f32 %v668, 0.00390625
          %v785 = vmul.f32 %v670, 0.00390625
          %v786 = vmul.f32 %v672, 0.00390625
          %v787 = vmul.f32 %v674, 0.00390625
          %v788 = vmul.f32 %v676, 0.00390625
          %v789 = vmul.f32 %v678, 0.00390625
          %v790 = vmul.f32 %v680, 0.00390625
          %v791 = vmul.f32 %v682, 0.00390625
          %v792 = vmul.f32 %v684, 0.00390625
          %v793 = vmul.f32 %v686, 0.00390625
          %v794 = vmul.f32 %v688, 0.00390625
          %v795 = vmul.f32 %v690, 0.00390625
          %v796 = vmul.f32 %v692, 0.00390625
          %v797 = vmul.f32 %v694, 0.00390625
          %v798 = vmul.f32 %v696, 0.00390625
          %v799 = vmul.f32 %v698, 0.00390625
          %v800 = vmul.f32 %v700, 0.00390625
          %v801 = vmul.f32 %v702, 0.00390625
          %v802 = vmul.f32 %v704, 0.00390625
          %v803 = vmul.f32 %v706, 0.00390625
          %v804 = vmul.f32 %v708, 0.00390625
          %v805 = vmul.f32 %v710, 0.00390625
          %v806 = vmul.f32 %v712, 0.00390625
          %v807 = vmul.f32 %v714, 0.00390625
          %v808 = vmul.f32 %v716, 0.00390625
          %v809 = vmul.f32 %v718, 0.00390625
          %v810 = vmul.f32 %v720, 0.00390625
          %v811 = vmul.f32 %v722, 0.00390625
          %v812 = vmul.f32 %v724, 0.00390625
          %v813 = vmul.f32 %v726, 0.00390625
          %v814 = vmul.f32 %v728, 0.00390625
          %v815 = vmul.f32 %v730, 0.00390625
          %v816 = vmul.f32 %v732, 0.00390625
          %v817 = vmul.f32 %v734, 0.00390625
          %v818 = vmul.f32 %v736, 0.00390625
          %v819 = vmul.f32 %v738, 0.00390625
          %v820 = vmul.f32 %v740, 0.00390625
          %v821 = vmul.f32 %v742, 0.00390625
          %v822 = vmul.f32 %v744, 0.00390625
          %v823 = vmul.f32 %v746, 0.00390625
          %v824 = vmul.f32 %v748, 0.00390625
          %v825 = vmul.f32 %v750, 0.00390625
          %v826 = vmul.f32 %v752, 0.00390625
          %v827 = vmul.f32 %v754, 0.00390625
          %v828 = vmul.f32 %v756, 0.00390625
          %v829 = vmul.f32 %v758, 0.00390625
          %v830 = vmul.f32 %v760, 0.00390625
          %v831 = vmul.f32 %v762, 0.00390625
          %v832 = vmul.f32 %v764, 0.00390625
          %v833 = vmul.f32 %v766, 0.00390625
          %v834 = vmul.f32 %v768, 0.00390625
          %v835 = vmul.f32 %v770, 0.00390625
          %v836 = vmul.f32 %v772, 0.00390625
          %v837 = vld [vmem:[%s3] sm:$0xf]
          %v838 = vmul.f32 %v773, %v773
          %v839 = vmul.f32 %v774, %v774
          %v840 = vmul.f32 %v775, %v775
          %v841 = vmul.f32 %v776, %v776
          %v842 = vmul.f32 %v777, %v777
          %v843 = vmul.f32 %v778, %v778
          %v844 = vmul.f32 %v779, %v779
          %v845 = vmul.f32 %v780, %v780
          %v846 = vmul.f32 %v781, %v781
          %v847 = vmul.f32 %v782, %v782
          %v848 = vmul.f32 %v783, %v783
          %v849 = vmul.f32 %v784, %v784
          %v850 = vmul.f32 %v785, %v785
          %v851 = vmul.f32 %v786, %v786
          %v852 = vmul.f32 %v787, %v787
          %v853 = vmul.f32 %v788, %v788
          %v854 = vmul.f32 %v789, %v789
          %v855 = vmul.f32 %v790, %v790
          %v856 = vmul.f32 %v791, %v791
          %v857 = vmul.f32 %v792, %v792
          %v858 = vmul.f32 %v793, %v793
          %v859 = vmul.f32 %v794, %v794
          %v860 = vmul.f32 %v795, %v795
          %v861 = vmul.f32 %v796, %v796
          %v862 = vmul.f32 %v797, %v797
          %v863 = vmul.f32 %v798, %v798
          %v864 = vmul.f32 %v799, %v799
          %v865 = vmul.f32 %v800, %v800
          %v866 = vmul.f32 %v801, %v801
          %v867 = vmul.f32 %v802, %v802
          %v868 = vmul.f32 %v803, %v803
          %v869 = vmul.f32 %v804, %v804
          %v870 = vmul.f32 %v805, %v805
          %v871 = vmul.f32 %v806, %v806
          %v872 = vmul.f32 %v807, %v807
          %v873 = vmul.f32 %v808, %v808
          %v874 = vmul.f32 %v809, %v809
          %v875 = vmul.f32 %v810, %v810
          %v876 = vmul.f32 %v811, %v811
          %v877 = vmul.f32 %v812, %v812
          %v878 = vmul.f32 %v813, %v813
          %v879 = vmul.f32 %v814, %v814
          %v880 = vmul.f32 %v815, %v815
          %v881 = vmul.f32 %v816, %v816
          %v882 = vmul.f32 %v817, %v817
          %v883 = vmul.f32 %v818, %v818
          %v884 = vmul.f32 %v819, %v819
          %v885 = vmul.f32 %v820, %v820
          %v886 = vmul.f32 %v821, %v821
          %v887 = vmul.f32 %v822, %v822
          %v888 = vmul.f32 %v823, %v823
          %v889 = vmul.f32 %v824, %v824
          %v890 = vmul.f32 %v825, %v825
          %v891 = vmul.f32 %v826, %v826
          %v892 = vmul.f32 %v827, %v827
          %v893 = vmul.f32 %v828, %v828
          %v894 = vmul.f32 %v829, %v829
          %v895 = vmul.f32 %v830, %v830
          %v896 = vmul.f32 %v831, %v831
          %v897 = vmul.f32 %v832, %v832
          %v898 = vmul.f32 %v833, %v833
          %v899 = vmul.f32 %v834, %v834
          %v900 = vmul.f32 %v835, %v835
          %v901 = vmul.f32 %v836, %v836
          %v966 = vlaneseq
          %v967 = vand.u32 %v966, 127
          %v968 = vperm.slane %v838, %v967
          %v969 = vadd.s32 %v967, 4294967288
          %v970 = vperm.slane %v839, %v969
          %vm971 = vcmask 130112
          %v972 = vsel %vm971, %v970, %v968
          %v973 = vadd.s32 %v967, 4294967280
          %v974 = vperm.slane %v840, %v973
          %vm975 = vcmask 195712
          %v976 = vsel %vm975, %v974, %v972
          %v977 = vadd.s32 %v967, 4294967272
          %v978 = vperm.slane %v841, %v977
          %vm979 = vcmask 261312
          %v980 = vsel %vm979, %v978, %v976
          %v981 = vadd.s32 %v967, 4294967264
          %v982 = vperm.slane %v842, %v981
          %vm983 = vcmask 326912
          %v984 = vsel %vm983, %v982, %v980
          %v985 = vadd.s32 %v967, 4294967256
          %v986 = vperm.slane %v843, %v985
          %vm987 = vcmask 392512
          %v988 = vsel %vm987, %v986, %v984
          %v989 = vadd.s32 %v967, 4294967248
          %v990 = vperm.slane %v844, %v989
          %vm991 = vcmask 458112
          %v992 = vsel %vm991, %v990, %v988
          %v993 = vadd.s32 %v967, 4294967240
          %v994 = vperm.slane %v845, %v993
          %vm995 = vcmask 523712
          %v996 = vsel %vm995, %v994, %v992
          %v997 = vperm.slane %v846, %v967
          %v998 = vperm.slane %v847, %v969
          %v999 = vsel %vm971, %v998, %v997
          %v1000 = vperm.slane %v848, %v973
          %v1001 = vsel %vm975, %v1000, %v999
          %v1002 = vperm.slane %v849, %v977
          %v1003 = vsel %vm979, %v1002, %v1001
          %v1004 = vperm.slane %v850, %v981
          %v1005 = vsel %vm983, %v1004, %v1003
          %v1006 = vperm.slane %v851, %v985
          %v1007 = vsel %vm987, %v1006, %v1005
          %v1008 = vperm.slane %v852, %v989
          %v1009 = vsel %vm991, %v1008, %v1007
          %v1010 = vperm.slane %v853, %v993
          %v1011 = vsel %vm995, %v1010, %v1009
          %v1012 = vperm.slane %v854, %v967
          %v1013 = vperm.slane %v855, %v969
          %v1014 = vsel %vm971, %v1013, %v1012
          %v1015 = vperm.slane %v856, %v973
          %v1016 = vsel %vm975, %v1015, %v1014
          %v1017 = vperm.slane %v857, %v977
          %v1018 = vsel %vm979, %v1017, %v1016
          %v1019 = vperm.slane %v858, %v981
          %v1020 = vsel %vm983, %v1019, %v1018
          %v1021 = vperm.slane %v859, %v985
          %v1022 = vsel %vm987, %v1021, %v1020
          %v1023 = vperm.slane %v860, %v989
          %v1024 = vsel %vm991, %v1023, %v1022
          %v1025 = vperm.slane %v861, %v993
          %v1026 = vsel %vm995, %v1025, %v1024
          %v1027 = vperm.slane %v862, %v967
          %v1028 = vperm.slane %v863, %v969
          %v1029 = vsel %vm971, %v1028, %v1027
          %v1030 = vperm.slane %v864, %v973
          %v1031 = vsel %vm975, %v1030, %v1029
          %v1032 = vperm.slane %v865, %v977
          %v1033 = vsel %vm979, %v1032, %v1031
          %v1034 = vperm.slane %v866, %v981
          %v1035 = vsel %vm983, %v1034, %v1033
          %v1036 = vperm.slane %v867, %v985
          %v1037 = vsel %vm987, %v1036, %v1035
          %v1038 = vperm.slane %v868, %v989
          %v1039 = vsel %vm991, %v1038, %v1037
          %v1040 = vperm.slane %v869, %v993
          %v1041 = vsel %vm995, %v1040, %v1039
          %v1042 = vperm.slane %v870, %v967
          %v1043 = vperm.slane %v871, %v969
          %v1044 = vsel %vm971, %v1043, %v1042
          %v1045 = vperm.slane %v872, %v973
          %v1046 = vsel %vm975, %v1045, %v1044
          %v1047 = vperm.slane %v873, %v977
          %v1048 = vsel %vm979, %v1047, %v1046
          %v1049 = vperm.slane %v874, %v981
          %v1050 = vsel %vm983, %v1049, %v1048
          %v1051 = vperm.slane %v875, %v985
          %v1052 = vsel %vm987, %v1051, %v1050
          %v1053 = vperm.slane %v876, %v989
          %v1054 = vsel %vm991, %v1053, %v1052
          %v1055 = vperm.slane %v877, %v993
          %v1056 = vsel %vm995, %v1055, %v1054
          %v1057 = vperm.slane %v878, %v967
          %v1058 = vperm.slane %v879, %v969
          %v1059 = vsel %vm971, %v1058, %v1057
          %v1060 = vperm.slane %v880, %v973
          %v1061 = vsel %vm975, %v1060, %v1059
          %v1062 = vperm.slane %v881, %v977
          %v1063 = vsel %vm979, %v1062, %v1061
          %v1064 = vperm.slane %v882, %v981
          %v1065 = vsel %vm983, %v1064, %v1063
          %v1066 = vperm.slane %v883, %v985
          %v1067 = vsel %vm987, %v1066, %v1065
          %v1068 = vperm.slane %v884, %v989
          %v1069 = vsel %vm991, %v1068, %v1067
          %v1070 = vperm.slane %v885, %v993
          %v1071 = vsel %vm995, %v1070, %v1069
          %v1072 = vperm.slane %v886, %v967
          %v1073 = vperm.slane %v887, %v969
          %v1074 = vsel %vm971, %v1073, %v1072
          %v1075 = vperm.slane %v888, %v973
          %v1076 = vsel %vm975, %v1075, %v1074
          %v1077 = vperm.slane %v889, %v977
          %v1078 = vsel %vm979, %v1077, %v1076
          %v1079 = vperm.slane %v890, %v981
          %v1080 = vsel %vm983, %v1079, %v1078
          %v1081 = vperm.slane %v891, %v985
          %v1082 = vsel %vm987, %v1081, %v1080
          %v1083 = vperm.slane %v892, %v989
          %v1084 = vsel %vm991, %v1083, %v1082
          %v1085 = vperm.slane %v893, %v993
          %v1086 = vsel %vm995, %v1085, %v1084
          %v1087 = vperm.slane %v894, %v967
          %v1088 = vperm.slane %v895, %v969
          %v1089 = vsel %vm971, %v1088, %v1087
          %v1090 = vperm.slane %v896, %v973
          %v1091 = vsel %vm975, %v1090, %v1089
          %v1092 = vperm.slane %v897, %v977
          %v1093 = vsel %vm979, %v1092, %v1091
          %v1094 = vperm.slane %v898, %v981
          %v1095 = vsel %vm983, %v1094, %v1093
          %v1096 = vperm.slane %v899, %v985
          %v1097 = vsel %vm987, %v1096, %v1095
          %v1098 = vperm.slane %v900, %v989
          %v1099 = vsel %vm991, %v1098, %v1097
          %v1100 = vperm.slane %v901, %v993
          %v1101 = vsel %vm995, %v1100, %v1099
          %vm1102 = vcmask 1041409
          %v1103 = vsel %vm1102, %v1011, %v996
          %vm1104 = vcmask 1042434
          %v1105 = vsel %vm1104, %v1026, %v1103
          %vm1106 = vcmask 1043459
          %v1107 = vsel %vm1106, %v1041, %v1105
          %vm1108 = vcmask 1044484
          %v1109 = vsel %vm1108, %v1056, %v1107
          %vm1110 = vcmask 1045509
          %v1111 = vsel %vm1110, %v1071, %v1109
          %vm1112 = vcmask 1046534
          %v1113 = vsel %vm1112, %v1086, %v1111
          %vm1114 = vcmask 1047559
          %v1115 = vsel %vm1114, %v1101, %v1113
          %vm1117 = vcmask 523264
          %v1118 = vsel %vm1117, %v1115, 0.0
          %1119 = vadd.xlane.f32.xlu0 %v1118
          %v1120 = vpop.xlane.xlu0 %1119
          %v1185 = vperm.slane %v773, %v967
          %v1186 = vperm.slane %v774, %v969
          %v1187 = vsel %vm971, %v1186, %v1185
          %v1188 = vperm.slane %v775, %v973
          %v1189 = vsel %vm975, %v1188, %v1187
          %v1190 = vperm.slane %v776, %v977
          %v1191 = vsel %vm979, %v1190, %v1189
          %v1192 = vperm.slane %v777, %v981
          %v1193 = vsel %vm983, %v1192, %v1191
          %v1194 = vperm.slane %v778, %v985
          %v1195 = vsel %vm987, %v1194, %v1193
          %v1196 = vperm.slane %v779, %v989
          %v1197 = vsel %vm991, %v1196, %v1195
          %v1198 = vperm.slane %v780, %v993
          %v1199 = vsel %vm995, %v1198, %v1197
          %v1200 = vperm.slane %v781, %v967
          %v1201 = vperm.slane %v782, %v969
          %v1202 = vsel %vm971, %v1201, %v1200
          %v1203 = vperm.slane %v783, %v973
          %v1204 = vsel %vm975, %v1203, %v1202
          %v1205 = vperm.slane %v784, %v977
          %v1206 = vsel %vm979, %v1205, %v1204
          %v1207 = vperm.slane %v785, %v981
          %v1208 = vsel %vm983, %v1207, %v1206
          %v1209 = vperm.slane %v786, %v985
          %v1210 = vsel %vm987, %v1209, %v1208
          %v1211 = vperm.slane %v787, %v989
          %v1212 = vsel %vm991, %v1211, %v1210
          %v1213 = vperm.slane %v788, %v993
          %v1214 = vsel %vm995, %v1213, %v1212
          %v1215 = vperm.slane %v789, %v967
          %v1216 = vperm.slane %v790, %v969
          %v1217 = vsel %vm971, %v1216, %v1215
          %v1218 = vperm.slane %v791, %v973
          %v1219 = vsel %vm975, %v1218, %v1217
          %v1220 = vperm.slane %v792, %v977
          %v1221 = vsel %vm979, %v1220, %v1219
          %v1222 = vperm.slane %v793, %v981
          %v1223 = vsel %vm983, %v1222, %v1221
          %v1224 = vperm.slane %v794, %v985
          %v1225 = vsel %vm987, %v1224, %v1223
          %v1226 = vperm.slane %v795, %v989
          %v1227 = vsel %vm991, %v1226, %v1225
          %v1228 = vperm.slane %v796, %v993
          %v1229 = vsel %vm995, %v1228, %v1227
          %v1230 = vperm.slane %v797, %v967
          %v1231 = vperm.slane %v798, %v969
          %v1232 = vsel %vm971, %v1231, %v1230
          %v1233 = vperm.slane %v799, %v973
          %v1234 = vsel %vm975, %v1233, %v1232
          %v1235 = vperm.slane %v800, %v977
          %v1236 = vsel %vm979, %v1235, %v1234
          %v1237 = vperm.slane %v801, %v981
          %v1238 = vsel %vm983, %v1237, %v1236
          %v1239 = vperm.slane %v802, %v985
          %v1240 = vsel %vm987, %v1239, %v1238
          %v1241 = vperm.slane %v803, %v989
          %v1242 = vsel %vm991, %v1241, %v1240
          %v1243 = vperm.slane %v804, %v993
          %v1244 = vsel %vm995, %v1243, %v1242
          %v1245 = vperm.slane %v805, %v967
          %v1246 = vperm.slane %v806, %v969
          %v1247 = vsel %vm971, %v1246, %v1245
          %v1248 = vperm.slane %v807, %v973
          %v1249 = vsel %vm975, %v1248, %v1247
          %v1250 = vperm.slane %v808, %v977
          %v1251 = vsel %vm979, %v1250, %v1249
          %v1252 = vperm.slane %v809, %v981
          %v1253 = vsel %vm983, %v1252, %v1251
          %v1254 = vperm.slane %v810, %v985
          %v1255 = vsel %vm987, %v1254, %v1253
          %v1256 = vperm.slane %v811, %v989
          %v1257 = vsel %vm991, %v1256, %v1255
          %v1258 = vperm.slane %v812, %v993
          %v1259 = vsel %vm995, %v1258, %v1257
          %v1260 = vperm.slane %v813, %v967
          %v1261 = vperm.slane %v814, %v969
          %v1262 = vsel %vm971, %v1261, %v1260
          %v1263 = vperm.slane %v815, %v973
          %v1264 = vsel %vm975, %v1263, %v1262
          %v1265 = vperm.slane %v816, %v977
          %v1266 = vsel %vm979, %v1265, %v1264
          %v1267 = vperm.slane %v817, %v981
          %v1268 = vsel %vm983, %v1267, %v1266
          %v1269 = vperm.slane %v818, %v985
          %v1270 = vsel %vm987, %v1269, %v1268
          %v1271 = vperm.slane %v819, %v989
          %v1272 = vsel %vm991, %v1271, %v1270
          %v1273 = vperm.slane %v820, %v993
          %v1274 = vsel %vm995, %v1273, %v1272
          %v1275 = vperm.slane %v821, %v967
          %v1276 = vperm.slane %v822, %v969
          %v1277 = vsel %vm971, %v1276, %v1275
          %v1278 = vperm.slane %v823, %v973
          %v1279 = vsel %vm975, %v1278, %v1277
          %v1280 = vperm.slane %v824, %v977
          %v1281 = vsel %vm979, %v1280, %v1279
          %v1282 = vperm.slane %v825, %v981
          %v1283 = vsel %vm983, %v1282, %v1281
          %v1284 = vperm.slane %v826, %v985
          %v1285 = vsel %vm987, %v1284, %v1283
          %v1286 = vperm.slane %v827, %v989
          %v1287 = vsel %vm991, %v1286, %v1285
          %v1288 = vperm.slane %v828, %v993
          %v1289 = vsel %vm995, %v1288, %v1287
          %v1290 = vperm.slane %v829, %v967
          %v1291 = vperm.slane %v830, %v969
          %v1292 = vsel %vm971, %v1291, %v1290
          %v1293 = vperm.slane %v831, %v973
          %v1294 = vsel %vm975, %v1293, %v1292
          %v1295 = vperm.slane %v832, %v977
          %v1296 = vsel %vm979, %v1295, %v1294
          %v1297 = vperm.slane %v833, %v981
          %v1298 = vsel %vm983, %v1297, %v1296
          %v1299 = vperm.slane %v834, %v985
          %v1300 = vsel %vm987, %v1299, %v1298
          %v1301 = vperm.slane %v835, %v989
          %v1302 = vsel %vm991, %v1301, %v1300
          %v1303 = vperm.slane %v836, %v993
          %v1304 = vsel %vm995, %v1303, %v1302
          %v1305 = vsel %vm1102, %v1214, %v1199
          %v1306 = vsel %vm1104, %v1229, %v1305
          %v1307 = vsel %vm1106, %v1244, %v1306
          %v1308 = vsel %vm1108, %v1259, %v1307
          %v1309 = vsel %vm1110, %v1274, %v1308
          %v1310 = vsel %vm1112, %v1289, %v1309
          %v1311 = vsel %vm1114, %v1304, %v1310
          %v1312 = vsel %vm1117, %v1311, 0
          %v1315 = vsel %vm1117, %v837, 0
          %1317 = vmatpush.xpose.msra.mxu0 0.0
          %1318 = vmatpush.xpose.msra.mxu0 0.0
          %1319 = vmatpush.xpose.msra.mxu0 0.0
          %1320 = vmatpush.xpose.msra.mxu0 0.0
          %1321 = vmatpush.xpose.msra.mxu0 0.0
          %1322 = vmatpush.xpose.msra.mxu0 0.0
          %1323 = vmatpush.xpose.msra.mxu0 0.0
          %1324 = vmatpush.xpose.msra.mxu0 0.0
          %1325 = vmatpush.xpose.msra.mxu0 0.0
          %1326 = vmatpush.xpose.msra.mxu0 0.0
          %1327 = vmatpush.xpose.msra.mxu0 0.0
          %1328 = vmatpush.xpose.msra.mxu0 0.0
          %1329 = vmatpush.xpose.msra.mxu0 0.0
          %1330 = vmatpush.xpose.msra.mxu0 0.0
          %1331 = vmatpush.xpose.msra.mxu0 0.0
          %v1332 = vand.u32 %v1315, 4294901760
          %1333 = vmatpush.xpose.msra.mxu0 %v1332
          %v1334 = vand.u32 %v1312, 4294901760
          %v1335 = vsub.f32 %v1312, %v1334
          %v1336 = vand.u32 %v1335, 4294901760
          %v1337 = vsub.f32 %v1335, %v1336
          %v1338 = vand.u32 %v1337, 4294901760
          %1339 = vmatmul.f32.gmra.mxu0 %v1338
          %v1340 = vpop.f32.mrf.mxu0
          %v1341 = vadd.f32 0.0, %v1340
          %1342 = vdwg.mxu0
          %1343 = vmatpush.xpose.msra.mxu0 0.0
          %1344 = vmatpush.xpose.msra.mxu0 0.0
          %1345 = vmatpush.xpose.msra.mxu0 0.0
          %1346 = vmatpush.xpose.msra.mxu0 0.0
          %1347 = vmatpush.xpose.msra.mxu0 0.0
          %1348 = vmatpush.xpose.msra.mxu0 0.0
          %1349 = vmatpush.xpose.msra.mxu0 0.0
          %1350 = vmatpush.xpose.msra.mxu0 0.0
          %1351 = vmatpush.xpose.msra.mxu0 0.0
          %1352 = vmatpush.xpose.msra.mxu0 0.0
          %1353 = vmatpush.xpose.msra.mxu0 0.0
          %1354 = vmatpush.xpose.msra.mxu0 0.0
          %1355 = vmatpush.xpose.msra.mxu0 0.0
          %1356 = vmatpush.xpose.msra.mxu0 0.0
          %1357 = vmatpush.xpose.msra.mxu0 0.0
          %v1358 = vand.u32 %v1315, 4294901760
          %v1359 = vsub.f32 %v1315, %v1358
          %v1360 = vand.u32 %v1359, 4294901760
          %v1361 = vsub.f32 %v1359, %v1360
          %v1362 = vand.u32 %v1361, 4294901760
          %1363 = vmatpush.xpose.msra.mxu0 %v1362
          %v1364 = vand.u32 %v1312, 4294901760
          %1365 = vmatmul.f32.gmra.mxu0 %v1364
          %v1366 = vpop.f32.mrf.mxu0
          %v1367 = vadd.f32 %v1341, %v1366
          %1368 = vdwg.mxu0
          %1369 = vmatpush.xpose.msra.mxu0 0.0
          %1370 = vmatpush.xpose.msra.mxu0 0.0
          %1371 = vmatpush.xpose.msra.mxu0 0.0
          %1372 = vmatpush.xpose.msra.mxu0 0.0
          %1373 = vmatpush.xpose.msra.mxu0 0.0
          %1374 = vmatpush.xpose.msra.mxu0 0.0
          %1375 = vmatpush.xpose.msra.mxu0 0.0
          %1376 = vmatpush.xpose.msra.mxu0 0.0
          %1377 = vmatpush.xpose.msra.mxu0 0.0
          %1378 = vmatpush.xpose.msra.mxu0 0.0
          %1379 = vmatpush.xpose.msra.mxu0 0.0
          %1380 = vmatpush.xpose.msra.mxu0 0.0
          %1381 = vmatpush.xpose.msra.mxu0 0.0
          %1382 = vmatpush.xpose.msra.mxu0 0.0
          %1383 = vmatpush.xpose.msra.mxu0 0.0
          %v1384 = vand.u32 %v1315, 4294901760
          %v1385 = vsub.f32 %v1315, %v1384
          %1386 = vmatpush.xpose.msra.mxu0 %v1385
          %v1387 = vand.u32 %v1312, 4294901760
          %v1388 = vsub.f32 %v1312, %v1387
          %1389 = vmatmul.f32.gmra.mxu0 %v1388
          %v1390 = vpop.f32.mrf.mxu0
          %v1391 = vadd.f32 %v1367, %v1390
          %1392 = vdwg.mxu0
          %1393 = vmatpush.xpose.msra.mxu0 0.0
          %1394 = vmatpush.xpose.msra.mxu0 0.0
          %1395 = vmatpush.xpose.msra.mxu0 0.0
          %1396 = vmatpush.xpose.msra.mxu0 0.0
          %1397 = vmatpush.xpose.msra.mxu0 0.0
          %1398 = vmatpush.xpose.msra.mxu0 0.0
          %1399 = vmatpush.xpose.msra.mxu0 0.0
          %1400 = vmatpush.xpose.msra.mxu0 0.0
          %1401 = vmatpush.xpose.msra.mxu0 0.0
          %1402 = vmatpush.xpose.msra.mxu0 0.0
          %1403 = vmatpush.xpose.msra.mxu0 0.0
          %1404 = vmatpush.xpose.msra.mxu0 0.0
          %1405 = vmatpush.xpose.msra.mxu0 0.0
          %1406 = vmatpush.xpose.msra.mxu0 0.0
          %1407 = vmatpush.xpose.msra.mxu0 0.0
          %v1408 = vand.u32 %v1315, 4294901760
          %1409 = vmatpush.xpose.msra.mxu0 %v1408
          %v1410 = vand.u32 %v1312, 4294901760
          %v1411 = vsub.f32 %v1312, %v1410
          %v1412 = vand.u32 %v1411, 4294901760
          %1413 = vmatmul.f32.gmra.mxu0 %v1412
          %v1414 = vpop.f32.mrf.mxu0
          %v1415 = vadd.f32 %v1391, %v1414
          %1416 = vdwg.mxu0
          %1417 = vmatpush.xpose.msra.mxu0 0.0
          %1418 = vmatpush.xpose.msra.mxu0 0.0
          %1419 = vmatpush.xpose.msra.mxu0 0.0
          %1420 = vmatpush.xpose.msra.mxu0 0.0
          %1421 = vmatpush.xpose.msra.mxu0 0.0
          %1422 = vmatpush.xpose.msra.mxu0 0.0
          %1423 = vmatpush.xpose.msra.mxu0 0.0
          %1424 = vmatpush.xpose.msra.mxu0 0.0
          %1425 = vmatpush.xpose.msra.mxu0 0.0
          %1426 = vmatpush.xpose.msra.mxu0 0.0
          %1427 = vmatpush.xpose.msra.mxu0 0.0
          %1428 = vmatpush.xpose.msra.mxu0 0.0
          %1429 = vmatpush.xpose.msra.mxu0 0.0
          %1430 = vmatpush.xpose.msra.mxu0 0.0
          %1431 = vmatpush.xpose.msra.mxu0 0.0
          %v1432 = vand.u32 %v1315, 4294901760
          %v1433 = vsub.f32 %v1315, %v1432
          %v1434 = vand.u32 %v1433, 4294901760
          %1435 = vmatpush.xpose.msra.mxu0 %v1434
          %v1436 = vand.u32 %v1312, 4294901760
          %1437 = vmatmul.f32.gmra.mxu0 %v1436
          %v1438 = vpop.f32.mrf.mxu0
          %v1439 = vadd.f32 %v1415, %v1438
          %1440 = vdwg.mxu0
          %1441 = vmatpush.xpose.msra.mxu0 0.0
          %1442 = vmatpush.xpose.msra.mxu0 0.0
          %1443 = vmatpush.xpose.msra.mxu0 0.0
          %1444 = vmatpush.xpose.msra.mxu0 0.0
          %1445 = vmatpush.xpose.msra.mxu0 0.0
          %1446 = vmatpush.xpose.msra.mxu0 0.0
          %1447 = vmatpush.xpose.msra.mxu0 0.0
          %1448 = vmatpush.xpose.msra.mxu0 0.0
          %1449 = vmatpush.xpose.msra.mxu0 0.0
          %1450 = vmatpush.xpose.msra.mxu0 0.0
          %1451 = vmatpush.xpose.msra.mxu0 0.0
          %1452 = vmatpush.xpose.msra.mxu0 0.0
          %1453 = vmatpush.xpose.msra.mxu0 0.0
          %1454 = vmatpush.xpose.msra.mxu0 0.0
          %1455 = vmatpush.xpose.msra.mxu0 0.0
          %v1456 = vand.u32 %v1315, 4294901760
          %1457 = vmatpush.xpose.msra.mxu0 %v1456
          %v1458 = vand.u32 %v1312, 4294901760
          %1459 = vmatmul.f32.gmra.mxu0 %v1458
          %v1460 = vpop.f32.mrf.mxu0
          %v1461 = vadd.f32 %v1439, %v1460
          %1462 = vdwg.mxu0
          %v1463 = vld [vmem:[%s2] sm:$0x1]
          %v1465 = vperm.slane %v1463, 0
          %v1467 = vadd.f32 %v1120, %v1465
          %v1468 = vmul.f32 %v1461, 2.0
          %v1469 = vsub.f32 %v1467, %v1468
          %v1470 = vld [vmem:[%s251] sm:$0xff]
          %v1471 = vmul.f32 %v1469, %v1470
          %v1472 = vmax.f32 %v1471, 1e-12
          %v1473 = vmin.f32 %v1472, 1e+12
          %vm1474 = vcmask 31744
          %v1475 = vsel %vm1474, %v1473, 0.0
          %1476 = vadd.xlane.f32.xlu0 %v1475
          %v1477 = vpop.xlane.xlu0 %1476
          %v1478 = vlaneseq
          %v1479 = vshrl.u32 %v1478, 7
          %v1480 = vstv %s252
          %v1481 = vadd.s32 %v1480, %v1479
          %vm1482 = vcmp.lt.s32.totalorder %v1481, 16
          %v1483 = vsel %vm1482, %v1477, 0.0
          %vm1484 = vcmask 7168
          %v1485 = vsel %vm1484, %v1483, 0.0
          %1486 = vadd.xlane.f32.xlu0 %v1485
          %v1487 = vpop.xlane.xlu0 %1486
          %v1488 = vrot.slane %v1487, 4
          %v1489 = vadd.f32 %v1487, %v1488
          %v1490 = vrot.slane %v1489, 2
          %v1491 = vadd.f32 %v1489, %v1490
          %v1492 = vrot.slane %v1491, 1
          %v1493 = vadd.f32 %v1491, %v1492
          %s1494 = vtos %v1493
          %v1495 = vstv %s1494
          %1496 = vst [vmem:[%s246] sm:$0xff] %v1495
        $region48: #{tpu_custom_call.1} parent=35 // pred_fallthru
          _
        %s1497 = sand.u32 %s137, 1
        %s1498 = scalar_lea.sflag [#allocation5], %s1497
        %s1499 = sand.u32 %s137, 1
        %s1500 = smul.addr %s1499, 8
        %s1501 = scalar_lea.vmem [#allocation6], %s1500
        // Predicated region
        $region49: #{tpu_custom_call.1} parent=35 // pred_check
          %p1502 = pneg %p147
        $region50: #{tpu_custom_call.1} parent=35 // pred_check_branch
          %1504 = sbr.rel (%p1502) target = $region52
        $region51: #{tpu_custom_call.1} parent=35 // pred_region
          %1506 = vsyncadd %s1498, 0
          %s1507 = smul.addr %s25, 8
          %s1508 = scalar_lea.hbm %s4, %s1507
          %s1510 = sshll.u32 %s1501, 4
          %s1511 = int_to_ptr.vmem [resolvable:$true] %s1510
          %s1512 = sshll.u32 %s1508, 4
          %s1513 = int_to_ptr.hbm [resolvable:$true] %s1512
          %1515 = dma.vmem_to_hbm [thread:$0]  %s1511, 128, %s1513, %s1498
        $region52: #{tpu_custom_call.1} parent=35 // pred_fallthru
          _
      $region36: #{tpu_custom_call.1} parent=5 // pred_fallthru
        _
      %p1516 = scmp.le.s32.totalorder 2, %s16
      // Predicated region
      $region53: #{tpu_custom_call.1} parent=5 // pred_check
        %p1517 = pneg %p1516
      $region54: #{tpu_custom_call.1} parent=5 // pred_check_branch
        %1519 = sbr.rel (%p1517) target = $region56
      $region55: #{tpu_custom_call.1} parent=5 // pred_region
        %s1520 = ssub.s32 %s16, 2
        // Predicated region
        $region57: #{tpu_custom_call.1} parent=55 // pred_check
          %p1521 = pneg %p153
        $region58: #{tpu_custom_call.1} parent=55 // pred_check_branch
          %1523 = sbr.rel (%p1521) target = $region60
        $region59: #{tpu_custom_call.1} parent=55 // pred_region
          %s1524 = sand.u32 %s138, 1
          %s1525 = scalar_lea.sflag [#allocation5], %s1524
          %s1526 = sand.u32 %s138, 1
          %s1527 = smul.addr %s1526, 8
          %s1528 = scalar_lea.vmem [#allocation6], %s1527
          %1530 = dma.done %s1525, 128
        $region60: #{tpu_custom_call.1} parent=55 // pred_fallthru
          _
      $region56: #{tpu_custom_call.1} parent=5 // pred_fallthru
        _
    $region6: #{tpu_custom_call.1} parent=1 // loop_footer
      %s20 = sadd.s32 1, %s16
    $region7: #{tpu_custom_call.1} parent=1 // loop_footer_branch
      %15 = sbr.rel target = $region3
    $region8: #{tpu_custom_call.1} parent=1 // loop_exit
      _
    %1531 = vsyncpa [#allocation4], 1
    %s1532 = scalar_lea.sflag [#allocation4], 1
    %1533 = vsyncpa %s1532, 1
    %1534 = vsyncpa [#allocation5], 1
    %s1535 = scalar_lea.sflag [#allocation5], 1
    %1536 = vsyncpa %s1535, 1

</llo_original>
